<compile_context>
chip_gen: v7x
topology: tpu7x:2x2x1
jax: 0.10.0
libtpu: 0.0.40
codegen_flags: <defaults>
</compile_context>

<pallas_src>
import functools

import jax
import jax.numpy as jnp
from jax import lax
from jax.experimental import pallas as pl
from jax.experimental.pallas import tpu as pltpu


def _encoder_kernel(x_ref, wemb_ref, bemb_ref, wih_ref, bgi_ref,
                    whhrz_ref, whhn_ref, bhn_ref, out_ref, *, seq_len, batch):
    """Whole-sequence GRU encoder in one kernel invocation.

    x_ref    : (S*B, X)   time-major, flattened input
    wemb_ref : (X, E)     embedding weight (pre-transposed)
    bemb_ref : (1, E)
    wih_ref  : (E, 3E)    input->gates weight, concatenated [r|z|n]
    bgi_ref  : (1, 3E)    b_ih with b_hh[r|z] pre-folded in (n column is b_in only)
    whhrz_ref: (E, 2E)    hidden->gates weight, [r|z] columns
    whhn_ref : (E, E)     hidden->gates weight, n column
    bhn_ref  : (1, E)     hidden n-gate bias (must stay inside r*(...))
    out_ref  : (S*B, E)   GRU outputs, time-major rows (dense (16,128) slab)
    """
    S, B = seq_len, batch
    E = wemb_ref.shape[1]

    # ---- non-recurrent, batched over ALL timesteps (off the serial path) ----
    emb = jnp.dot(x_ref[...], wemb_ref[...],
                  preferred_element_type=jnp.float32) + bemb_ref[...]
    emb = jnp.maximum(emb, 0.0)                                      # (S*B, E)
    gi = jnp.dot(emb, wih_ref[...],
                 preferred_element_type=jnp.float32) + bgi_ref[...]  # (S*B, 3E)

    whh_rz = whhrz_ref[...]                                          # (E, 2E)
    whh_n = whhn_ref[...]                                            # (E, E)
    bhn = bhn_ref[...]                                               # (1, E)

    # ---- t = 0 peeled: h_prev == 0  =>  gh_rz == 0, gh_n == 0 ---------------
    gi0 = gi[0:B, :]
    r = jax.nn.sigmoid(gi0[:, :E])               # b_hr already folded into gi
    z = jax.nn.sigmoid(gi0[:, E:2 * E])          # b_hz already folded into gi
    n = jnp.tanh(gi0[:, 2 * E:] + r * bhn)
    h = n - z * n                                # == (1 - z) * n + z * 0
    out_ref[0:B, :] = h.astype(out_ref.dtype)

    # ---- serial recurrence: two matmuls + gate math per step, unrolled ------
    for t in range(1, S):                        # S is small & static
        gi_t = gi[t * B:(t + 1) * B, :]                              # (B, 3E)
        gh_rz = jnp.dot(h, whh_rz, preferred_element_type=jnp.float32)
        gh_n = jnp.dot(h, whh_n, preferred_element_type=jnp.float32)
        r = jax.nn.sigmoid(gi_t[:, :E] + gh_rz[:, :E])
        z = jax.nn.sigmoid(gi_t[:, E:2 * E] + gh_rz[:, E:])
        n = jnp.tanh(gi_t[:, 2 * E:] + r * (gh_n + bhn))
        h = n + z * (h - n)                      # == (1 - z) * n + z * h
        out_ref[t * B:(t + 1) * B, :] = h.astype(out_ref.dtype)


@jax.jit
def encoder_forward(x, params):
    """x: (batch, seq, v_net_x_dim) -> (outputs (seq,batch,E), hidden (1,batch,E))."""
    w_emb, b_emb = params["w_emb"], params["b_emb"]
    w_ih, b_ih = params["w_ih"], params["b_ih"]
    w_hh, b_hh = params["w_hh"], params["b_hh"]
    B, S, X = x.shape
    E = w_emb.shape[1]

    # Module's x.permute(1, 0, 2) plus a flatten so the kernel sees 2-D
    # time-major rows (tiny relayout, fused by XLA).
    x2d = jnp.transpose(x, (1, 0, 2)).reshape(S * B, X)

    # Fold the r/z hidden biases into the batched input-gate bias; b_hn must
    # remain inside r*(W_hn h + b_hn), so it is passed separately.
    b_gi = b_ih + jnp.concatenate(
        [b_hh[:, :2 * E], jnp.zeros((1, E), b_hh.dtype)], axis=1)
    w_hh_rz = w_hh[:, :2 * E]
    w_hh_n = w_hh[:, 2 * E:]
    b_hn = b_hh[:, 2 * E:]

    kernel = functools.partial(_encoder_kernel, seq_len=S, batch=B)
    out2d = pl.pallas_call(
        kernel,
        out_shape=jax.ShapeDtypeStruct((S * B, E), jnp.float32),
        in_specs=[pl.BlockSpec(memory_space=pltpu.MemorySpace.VMEM)] * 8,
        out_specs=pl.BlockSpec(memory_space=pltpu.MemorySpace.VMEM),
        # No grid: total footprint < 0.5 MiB, weights loaded once, the time
        # recurrence runs as an in-kernel unrolled loop.
    )(x2d, w_emb, b_emb, w_ih, b_gi, w_hh_rz, w_hh_n, b_hn)

    outputs = out2d.reshape(S, B, E)
    hidden = outputs[-1:]                        # final hidden == last output
    return outputs, hidden


def init_params(key, v_net_x_dim, embedding_dim):
    """Deterministic init mimicking PyTorch uniform(-1/sqrt(fan_in), ...)."""
    E, X = embedding_dim, v_net_x_dim
    k = jax.random.split(key, 6)
    lin_b = 1.0 / (X ** 0.5)
    gru_b = 1.0 / (E ** 0.5)
    # Stored pre-transposed and with GRU gates concatenated [r|z|n].
    w_emb = jax.random.uniform(k[0], (X, E), jnp.float32, -lin_b, lin_b)
    b_emb = jax.random.uniform(k[1], (1, E), jnp.float32, -lin_b, lin_b)
    w_ih = jax.random.uniform(k[2], (E, 3 * E), jnp.float32, -gru_b, gru_b)
    b_ih = jax.random.uniform(k[3], (1, 3 * E), jnp.float32, -gru_b, gru_b)
    w_hh = jax.random.uniform(k[4], (E, 3 * E), jnp.float32, -gru_b, gru_b)
    b_hh = jax.random.uniform(k[5], (1, 3 * E), jnp.float32, -gru_b, gru_b)
    return {"w_emb": w_emb, "b_emb": b_emb, "w_ih": w_ih, "b_ih": b_ih,
            "w_hh": w_hh, "b_hh": b_hh}


def reference_forward(x, params):
    """Pure-JAX reference matching torch nn.Linear + relu + nn.GRU semantics."""
    w_emb, b_emb = params["w_emb"], params["b_emb"]
    w_ih, b_ih = params["w_ih"], params["b_ih"]
    w_hh, b_hh = params["w_hh"], params["b_hh"]
    E = w_emb.shape[1]
    hp = lax.Precision.HIGHEST
    x_tm = jnp.transpose(x, (1, 0, 2))                               # (S, B, X)
    emb = jax.nn.relu(jnp.einsum("sbx,xe->sbe", x_tm, w_emb, precision=hp)
                      + b_emb)

    def cell(h, e_t):
        gi = jnp.dot(e_t, w_ih, precision=hp) + b_ih
        gh = jnp.dot(h, w_hh, precision=hp) + b_hh
        r = jax.nn.sigmoid(gi[:, :E] + gh[:, :E])
        z = jax.nn.sigmoid(gi[:, E:2 * E] + gh[:, E:2 * E])
        n = jnp.tanh(gi[:, 2 * E:] + r * gh[:, 2 * E:])
        h_new = (1.0 - z) * n + z * h
        return h_new, h_new

    h0 = jnp.zeros((x.shape[0], E), jnp.float32)
    h_last, outs = lax.scan(cell, h0, emb)
    return outs, h_last[None]


if __name__ == "__main__":
    # Small shapes consistent with the module (embedding_dim uses the module
    # default of 128, which also makes the output lane-dense).
    batch, seq, v_net_x_dim, embedding_dim = 2, 8, 4, 128

    key = jax.random.PRNGKey(0)
    kx, kp = jax.random.split(key)
    x = jax.random.normal(kx, (batch, seq, v_net_x_dim), jnp.float32)
    params = init_params(kp, v_net_x_dim, embedding_dim)

    outputs, hidden = encoder_forward(x, params)
    jax.block_until_ready((outputs, hidden))

    ref_out, ref_hid = reference_forward(x, params)
    assert outputs.shape == (seq, batch, embedding_dim)
    assert hidden.shape == (1, batch, embedding_dim)
    assert jnp.allclose(outputs, ref_out, atol=1e-3, rtol=1e-3), \
        float(jnp.max(jnp.abs(outputs - ref_out)))
    assert jnp.allclose(hidden, ref_hid, atol=1e-3, rtol=1e-3)

    print("KERNEL_OK")
</pallas_src>

<mosaic_0001>
module attributes {stable_mosaic.version = 11 : i64} {
  func.func @_encoder_kernel(%arg0: memref<16x4xf32, #tpu.memory_space<vmem>>, %arg1: memref<4x128xf32, #tpu.memory_space<vmem>>, %arg2: memref<1x128xf32, #tpu.memory_space<vmem>>, %arg3: memref<128x384xf32, #tpu.memory_space<vmem>>, %arg4: memref<1x384xf32, #tpu.memory_space<vmem>>, %arg5: memref<128x256xf32, #tpu.memory_space<vmem>>, %arg6: memref<128x128xf32, #tpu.memory_space<vmem>>, %arg7: memref<1x128xf32, #tpu.memory_space<vmem>>, %arg8: memref<16x128xf32, #tpu.memory_space<vmem>>) attributes {dimension_semantics = [], scalar_prefetch = 0 : i64, scratch_operands = 0 : i64, tpu.core_type = #tpu.core_type<tc>} {
    %c0 = arith.constant 0 : index
    %c0_0 = arith.constant 0 : index
    %0 = vector.load %arg0[%c0, %c0_0] : memref<16x4xf32, #tpu.memory_space<vmem>>, vector<16x4xf32>
    %c0_1 = arith.constant 0 : index
    %c0_2 = arith.constant 0 : index
    %1 = vector.load %arg1[%c0_1, %c0_2] : memref<4x128xf32, #tpu.memory_space<vmem>>, vector<4x128xf32>
    %cst = arith.constant dense<0.000000e+00> : vector<16x128xf32>
    %2 = tpu.matmul %0, %1, %cst {dimension_numbers = #tpu.dot_dimension_numbers<[1], [0], [0], [1], [0, 0, 1, 1], [], []>} : vector<16x4xf32>, vector<4x128xf32>, vector<16x128xf32> -> vector<16x128xf32>
    %c0_3 = arith.constant 0 : index
    %c0_4 = arith.constant 0 : index
    %3 = vector.load %arg2[%c0_3, %c0_4] : memref<1x128xf32, #tpu.memory_space<vmem>>, vector<1x128xf32>
    %4 = vector.broadcast %3 : vector<1x128xf32> to vector<16x128xf32>
    %5 = arith.addf %2, %4 : vector<16x128xf32>
    %cst_5 = arith.constant 0.000000e+00 : f32
    %6 = vector.broadcast %cst_5 : f32 to vector<16x128xf32>
    %7 = arith.maximumf %5, %6 : vector<16x128xf32>
    %c0_6 = arith.constant 0 : index
    %c0_7 = arith.constant 0 : index
    %8 = vector.load %arg3[%c0_6, %c0_7] : memref<128x384xf32, #tpu.memory_space<vmem>>, vector<128x384xf32>
    %cst_8 = arith.constant dense<0.000000e+00> : vector<16x384xf32>
    %9 = tpu.matmul %7, %8, %cst_8 {dimension_numbers = #tpu.dot_dimension_numbers<[1], [0], [0], [1], [0, 0, 1, 1], [], []>} : vector<16x128xf32>, vector<128x384xf32>, vector<16x384xf32> -> vector<16x384xf32>
    %c0_9 = arith.constant 0 : index
    %c0_10 = arith.constant 0 : index
    %10 = vector.load %arg4[%c0_9, %c0_10] : memref<1x384xf32, #tpu.memory_space<vmem>>, vector<1x384xf32>
    %11 = vector.broadcast %10 : vector<1x384xf32> to vector<16x384xf32>
    %12 = arith.addf %9, %11 : vector<16x384xf32>
    %c0_11 = arith.constant 0 : index
    %c0_12 = arith.constant 0 : index
    %13 = vector.load %arg5[%c0_11, %c0_12] : memref<128x256xf32, #tpu.memory_space<vmem>>, vector<128x256xf32>
    %c0_13 = arith.constant 0 : index
    %c0_14 = arith.constant 0 : index
    %14 = vector.load %arg6[%c0_13, %c0_14] : memref<128x128xf32, #tpu.memory_space<vmem>>, vector<128x128xf32>
    %c0_15 = arith.constant 0 : index
    %c0_16 = arith.constant 0 : index
    %15 = vector.load %arg7[%c0_15, %c0_16] : memref<1x128xf32, #tpu.memory_space<vmem>>, vector<1x128xf32>
    %16 = vector.extract_strided_slice %12 {offsets = [0, 0], sizes = [2, 384], strides = [1, 1]} : vector<16x384xf32> to vector<2x384xf32>
    %17 = vector.extract_strided_slice %16 {offsets = [0, 0], sizes = [2, 128], strides = [1, 1]} : vector<2x384xf32> to vector<2x128xf32>
    %18 = arith.negf %17 : vector<2x128xf32>
    %19 = math.exp %18 : vector<2x128xf32>
    %cst_17 = arith.constant 1.000000e+00 : f32
    %20 = vector.broadcast %cst_17 : f32 to vector<2x128xf32>
    %21 = arith.addf %20, %19 : vector<2x128xf32>
    %22 = arith.divf %20, %21 : vector<2x128xf32>
    %23 = vector.extract_strided_slice %16 {offsets = [0, 128], sizes = [2, 128], strides = [1, 1]} : vector<2x384xf32> to vector<2x128xf32>
    %24 = arith.negf %23 : vector<2x128xf32>
    %25 = math.exp %24 : vector<2x128xf32>
    %cst_18 = arith.constant 1.000000e+00 : f32
    %26 = vector.broadcast %cst_18 : f32 to vector<2x128xf32>
    %27 = arith.addf %26, %25 : vector<2x128xf32>
    %28 = arith.divf %26, %27 : vector<2x128xf32>
    %29 = vector.extract_strided_slice %16 {offsets = [0, 256], sizes = [2, 128], strides = [1, 1]} : vector<2x384xf32> to vector<2x128xf32>
    %30 = vector.broadcast %15 : vector<1x128xf32> to vector<2x128xf32>
    %31 = arith.mulf %22, %30 : vector<2x128xf32>
    %32 = arith.addf %29, %31 : vector<2x128xf32>
    %33 = math.tanh %32 : vector<2x128xf32>
    %34 = arith.mulf %28, %33 : vector<2x128xf32>
    %35 = arith.subf %33, %34 : vector<2x128xf32>
    %c0_19 = arith.constant 0 : index
    %c0_20 = arith.constant 0 : index
    %36 = vector.load %arg8[%c0_19, %c0_20] : memref<16x128xf32, #tpu.memory_space<vmem>>, vector<2x128xf32>
    tpu.vector_store %arg8[%c0_19, %c0_20], %35 {strides = array<i32>} : memref<16x128xf32, #tpu.memory_space<vmem>>, vector<2x128xf32>,
    %37 = vector.extract_strided_slice %12 {offsets = [2, 0], sizes = [2, 384], strides = [1, 1]} : vector<16x384xf32> to vector<2x384xf32>
    %cst_21 = arith.constant dense<0.000000e+00> : vector<2x256xf32>
    %38 = tpu.matmul %35, %13, %cst_21 {dimension_numbers = #tpu.dot_dimension_numbers<[1], [0], [0], [1], [0, 0, 1, 1], [], []>} : vector<2x128xf32>, vector<128x256xf32>, vector<2x256xf32> -> vector<2x256xf32>
    %cst_22 = arith.constant dense<0.000000e+00> : vector<2x128xf32>
    %39 = tpu.matmul %35, %14, %cst_22 {dimension_numbers = #tpu.dot_dimension_numbers<[1], [0], [0], [1], [0, 0, 1, 1], [], []>} : vector<2x128xf32>, vector<128x128xf32>, vector<2x128xf32> -> vector<2x128xf32>
    %40 = vector.extract_strided_slice %37 {offsets = [0, 0], sizes = [2, 128], strides = [1, 1]} : vector<2x384xf32> to vector<2x128xf32>
    %41 = vector.extract_strided_slice %38 {offsets = [0, 0], sizes = [2, 128], strides = [1, 1]} : vector<2x256xf32> to vector<2x128xf32>
    %42 = arith.addf %40, %41 : vector<2x128xf32>
    %43 = arith.negf %42 : vector<2x128xf32>
    %44 = math.exp %43 : vector<2x128xf32>
    %cst_23 = arith.constant 1.000000e+00 : f32
    %45 = vector.broadcast %cst_23 : f32 to vector<2x128xf32>
    %46 = arith.addf %45, %44 : vector<2x128xf32>
    %47 = arith.divf %45, %46 : vector<2x128xf32>
    %48 = vector.extract_strided_slice %37 {offsets = [0, 128], sizes = [2, 128], strides = [1, 1]} : vector<2x384xf32> to vector<2x128xf32>
    %49 = vector.extract_strided_slice %38 {offsets = [0, 128], sizes = [2, 128], strides = [1, 1]} : vector<2x256xf32> to vector<2x128xf32>
    %50 = arith.addf %48, %49 : vector<2x128xf32>
    %51 = arith.negf %50 : vector<2x128xf32>
    %52 = math.exp %51 : vector<2x128xf32>
    %cst_24 = arith.constant 1.000000e+00 : f32
    %53 = vector.broadcast %cst_24 : f32 to vector<2x128xf32>
    %54 = arith.addf %53, %52 : vector<2x128xf32>
    %55 = arith.divf %53, %54 : vector<2x128xf32>
    %56 = vector.extract_strided_slice %37 {offsets = [0, 256], sizes = [2, 128], strides = [1, 1]} : vector<2x384xf32> to vector<2x128xf32>
    %57 = vector.broadcast %15 : vector<1x128xf32> to vector<2x128xf32>
    %58 = arith.addf %39, %57 : vector<2x128xf32>
    %59 = arith.mulf %47, %58 : vector<2x128xf32>
    %60 = arith.addf %56, %59 : vector<2x128xf32>
    %61 = math.tanh %60 : vector<2x128xf32>
    %62 = arith.subf %35, %61 : vector<2x128xf32>
    %63 = arith.mulf %55, %62 : vector<2x128xf32>
    %64 = arith.addf %61, %63 : vector<2x128xf32>
    %c2 = arith.constant 2 : index
    %c0_25 = arith.constant 0 : index
    %65 = vector.load %arg8[%c2, %c0_25] : memref<16x128xf32, #tpu.memory_space<vmem>>, vector<2x128xf32>
    tpu.vector_store %arg8[%c2, %c0_25], %64 {strides = array<i32>} : memref<16x128xf32, #tpu.memory_space<vmem>>, vector<2x128xf32>,
    %66 = vector.extract_strided_slice %12 {offsets = [4, 0], sizes = [2, 384], strides = [1, 1]} : vector<16x384xf32> to vector<2x384xf32>
    %cst_26 = arith.constant dense<0.000000e+00> : vector<2x256xf32>
    %67 = tpu.matmul %64, %13, %cst_26 {dimension_numbers = #tpu.dot_dimension_numbers<[1], [0], [0], [1], [0, 0, 1, 1], [], []>} : vector<2x128xf32>, vector<128x256xf32>, vector<2x256xf32> -> vector<2x256xf32>
    %cst_27 = arith.constant dense<0.000000e+00> : vector<2x128xf32>
    %68 = tpu.matmul %64, %14, %cst_27 {dimension_numbers = #tpu.dot_dimension_numbers<[1], [0], [0], [1], [0, 0, 1, 1], [], []>} : vector<2x128xf32>, vector<128x128xf32>, vector<2x128xf32> -> vector<2x128xf32>
    %69 = vector.extract_strided_slice %66 {offsets = [0, 0], sizes = [2, 128], strides = [1, 1]} : vector<2x384xf32> to vector<2x128xf32>
    %70 = vector.extract_strided_slice %67 {offsets = [0, 0], sizes = [2, 128], strides = [1, 1]} : vector<2x256xf32> to vector<2x128xf32>
    %71 = arith.addf %69, %70 : vector<2x128xf32>
    %72 = arith.negf %71 : vector<2x128xf32>
    %73 = math.exp %72 : vector<2x128xf32>
    %cst_28 = arith.constant 1.000000e+00 : f32
    %74 = vector.broadcast %cst_28 : f32 to vector<2x128xf32>
    %75 = arith.addf %74, %73 : vector<2x128xf32>
    %76 = arith.divf %74, %75 : vector<2x128xf32>
    %77 = vector.extract_strided_slice %66 {offsets = [0, 128], sizes = [2, 128], strides = [1, 1]} : vector<2x384xf32> to vector<2x128xf32>
    %78 = vector.extract_strided_slice %67 {offsets = [0, 128], sizes = [2, 128], strides = [1, 1]} : vector<2x256xf32> to vector<2x128xf32>
    %79 = arith.addf %77, %78 : vector<2x128xf32>
    %80 = arith.negf %79 : vector<2x128xf32>
    %81 = math.exp %80 : vector<2x128xf32>
    %cst_29 = arith.constant 1.000000e+00 : f32
    %82 = vector.broadcast %cst_29 : f32 to vector<2x128xf32>
    %83 = arith.addf %82, %81 : vector<2x128xf32>
    %84 = arith.divf %82, %83 : vector<2x128xf32>
    %85 = vector.extract_strided_slice %66 {offsets = [0, 256], sizes = [2, 128], strides = [1, 1]} : vector<2x384xf32> to vector<2x128xf32>
    %86 = vector.broadcast %15 : vector<1x128xf32> to vector<2x128xf32>
    %87 = arith.addf %68, %86 : vector<2x128xf32>
    %88 = arith.mulf %76, %87 : vector<2x128xf32>
    %89 = arith.addf %85, %88 : vector<2x128xf32>
    %90 = math.tanh %89 : vector<2x128xf32>
    %91 = arith.subf %64, %90 : vector<2x128xf32>
    %92 = arith.mulf %84, %91 : vector<2x128xf32>
    %93 = arith.addf %90, %92 : vector<2x128xf32>
    %c4 = arith.constant 4 : index
    %c0_30 = arith.constant 0 : index
    %94 = vector.load %arg8[%c4, %c0_30] : memref<16x128xf32, #tpu.memory_space<vmem>>, vector<2x128xf32>
    tpu.vector_store %arg8[%c4, %c0_30], %93 {strides = array<i32>} : memref<16x128xf32, #tpu.memory_space<vmem>>, vector<2x128xf32>,
    %95 = vector.extract_strided_slice %12 {offsets = [6, 0], sizes = [2, 384], strides = [1, 1]} : vector<16x384xf32> to vector<2x384xf32>
    %cst_31 = arith.constant dense<0.000000e+00> : vector<2x256xf32>
    %96 = tpu.matmul %93, %13, %cst_31 {dimension_numbers = #tpu.dot_dimension_numbers<[1], [0], [0], [1], [0, 0, 1, 1], [], []>} : vector<2x128xf32>, vector<128x256xf32>, vector<2x256xf32> -> vector<2x256xf32>
    %cst_32 = arith.constant dense<0.000000e+00> : vector<2x128xf32>
    %97 = tpu.matmul %93, %14, %cst_32 {dimension_numbers = #tpu.dot_dimension_numbers<[1], [0], [0], [1], [0, 0, 1, 1], [], []>} : vector<2x128xf32>, vector<128x128xf32>, vector<2x128xf32> -> vector<2x128xf32>
    %98 = vector.extract_strided_slice %95 {offsets = [0, 0], sizes = [2, 128], strides = [1, 1]} : vector<2x384xf32> to vector<2x128xf32>
    %99 = vector.extract_strided_slice %96 {offsets = [0, 0], sizes = [2, 128], strides = [1, 1]} : vector<2x256xf32> to vector<2x128xf32>
    %100 = arith.addf %98, %99 : vector<2x128xf32>
    %101 = arith.negf %100 : vector<2x128xf32>
    %102 = math.exp %101 : vector<2x128xf32>
    %cst_33 = arith.constant 1.000000e+00 : f32
    %103 = vector.broadcast %cst_33 : f32 to vector<2x128xf32>
    %104 = arith.addf %103, %102 : vector<2x128xf32>
    %105 = arith.divf %103, %104 : vector<2x128xf32>
    %106 = vector.extract_strided_slice %95 {offsets = [0, 128], sizes = [2, 128], strides = [1, 1]} : vector<2x384xf32> to vector<2x128xf32>
    %107 = vector.extract_strided_slice %96 {offsets = [0, 128], sizes = [2, 128], strides = [1, 1]} : vector<2x256xf32> to vector<2x128xf32>
    %108 = arith.addf %106, %107 : vector<2x128xf32>
    %109 = arith.negf %108 : vector<2x128xf32>
    %110 = math.exp %109 : vector<2x128xf32>
    %cst_34 = arith.constant 1.000000e+00 : f32
    %111 = vector.broadcast %cst_34 : f32 to vector<2x128xf32>
    %112 = arith.addf %111, %110 : vector<2x128xf32>
    %113 = arith.divf %111, %112 : vector<2x128xf32>
    %114 = vector.extract_strided_slice %95 {offsets = [0, 256], sizes = [2, 128], strides = [1, 1]} : vector<2x384xf32> to vector<2x128xf32>
    %115 = vector.broadcast %15 : vector<1x128xf32> to vector<2x128xf32>
    %116 = arith.addf %97, %115 : vector<2x128xf32>
    %117 = arith.mulf %105, %116 : vector<2x128xf32>
    %118 = arith.addf %114, %117 : vector<2x128xf32>
    %119 = math.tanh %118 : vector<2x128xf32>
    %120 = arith.subf %93, %119 : vector<2x128xf32>
    %121 = arith.mulf %113, %120 : vector<2x128xf32>
    %122 = arith.addf %119, %121 : vector<2x128xf32>
    %c6 = arith.constant 6 : index
    %c0_35 = arith.constant 0 : index
    %123 = vector.load %arg8[%c6, %c0_35] : memref<16x128xf32, #tpu.memory_space<vmem>>, vector<2x128xf32>
    tpu.vector_store %arg8[%c6, %c0_35], %122 {strides = array<i32>} : memref<16x128xf32, #tpu.memory_space<vmem>>, vector<2x128xf32>,
    %124 = vector.extract_strided_slice %12 {offsets = [8, 0], sizes = [2, 384], strides = [1, 1]} : vector<16x384xf32> to vector<2x384xf32>
    %cst_36 = arith.constant dense<0.000000e+00> : vector<2x256xf32>
    %125 = tpu.matmul %122, %13, %cst_36 {dimension_numbers = #tpu.dot_dimension_numbers<[1], [0], [0], [1], [0, 0, 1, 1], [], []>} : vector<2x128xf32>, vector<128x256xf32>, vector<2x256xf32> -> vector<2x256xf32>
    %cst_37 = arith.constant dense<0.000000e+00> : vector<2x128xf32>
    %126 = tpu.matmul %122, %14, %cst_37 {dimension_numbers = #tpu.dot_dimension_numbers<[1], [0], [0], [1], [0, 0, 1, 1], [], []>} : vector<2x128xf32>, vector<128x128xf32>, vector<2x128xf32> -> vector<2x128xf32>
    %127 = vector.extract_strided_slice %124 {offsets = [0, 0], sizes = [2, 128], strides = [1, 1]} : vector<2x384xf32> to vector<2x128xf32>
    %128 = vector.extract_strided_slice %125 {offsets = [0, 0], sizes = [2, 128], strides = [1, 1]} : vector<2x256xf32> to vector<2x128xf32>
    %129 = arith.addf %127, %128 : vector<2x128xf32>
    %130 = arith.negf %129 : vector<2x128xf32>
    %131 = math.exp %130 : vector<2x128xf32>
    %cst_38 = arith.constant 1.000000e+00 : f32
    %132 = vector.broadcast %cst_38 : f32 to vector<2x128xf32>
    %133 = arith.addf %132, %131 : vector<2x128xf32>
    %134 = arith.divf %132, %133 : vector<2x128xf32>
    %135 = vector.extract_strided_slice %124 {offsets = [0, 128], sizes = [2, 128], strides = [1, 1]} : vector<2x384xf32> to vector<2x128xf32>
    %136 = vector.extract_strided_slice %125 {offsets = [0, 128], sizes = [2, 128], strides = [1, 1]} : vector<2x256xf32> to vector<2x128xf32>
    %137 = arith.addf %135, %136 : vector<2x128xf32>
    %138 = arith.negf %137 : vector<2x128xf32>
    %139 = math.exp %138 : vector<2x128xf32>
    %cst_39 = arith.constant 1.000000e+00 : f32
    %140 = vector.broadcast %cst_39 : f32 to vector<2x128xf32>
    %141 = arith.addf %140, %139 : vector<2x128xf32>
    %142 = arith.divf %140, %141 : vector<2x128xf32>
    %143 = vector.extract_strided_slice %124 {offsets = [0, 256], sizes = [2, 128], strides = [1, 1]} : vector<2x384xf32> to vector<2x128xf32>
    %144 = vector.broadcast %15 : vector<1x128xf32> to vector<2x128xf32>
    %145 = arith.addf %126, %144 : vector<2x128xf32>
    %146 = arith.mulf %134, %145 : vector<2x128xf32>
    %147 = arith.addf %143, %146 : vector<2x128xf32>
    %148 = math.tanh %147 : vector<2x128xf32>
    %149 = arith.subf %122, %148 : vector<2x128xf32>
    %150 = arith.mulf %142, %149 : vector<2x128xf32>
    %151 = arith.addf %148, %150 : vector<2x128xf32>
    %c8 = arith.constant 8 : index
    %c0_40 = arith.constant 0 : index
    %152 = vector.load %arg8[%c8, %c0_40] : memref<16x128xf32, #tpu.memory_space<vmem>>, vector<2x128xf32>
    tpu.vector_store %arg8[%c8, %c0_40], %151 {strides = array<i32>} : memref<16x128xf32, #tpu.memory_space<vmem>>, vector<2x128xf32>,
    %153 = vector.extract_strided_slice %12 {offsets = [10, 0], sizes = [2, 384], strides = [1, 1]} : vector<16x384xf32> to vector<2x384xf32>
    %cst_41 = arith.constant dense<0.000000e+00> : vector<2x256xf32>
    %154 = tpu.matmul %151, %13, %cst_41 {dimension_numbers = #tpu.dot_dimension_numbers<[1], [0], [0], [1], [0, 0, 1, 1], [], []>} : vector<2x128xf32>, vector<128x256xf32>, vector<2x256xf32> -> vector<2x256xf32>
    %cst_42 = arith.constant dense<0.000000e+00> : vector<2x128xf32>
    %155 = tpu.matmul %151, %14, %cst_42 {dimension_numbers = #tpu.dot_dimension_numbers<[1], [0], [0], [1], [0, 0, 1, 1], [], []>} : vector<2x128xf32>, vector<128x128xf32>, vector<2x128xf32> -> vector<2x128xf32>
    %156 = vector.extract_strided_slice %153 {offsets = [0, 0], sizes = [2, 128], strides = [1, 1]} : vector<2x384xf32> to vector<2x128xf32>
    %157 = vector.extract_strided_slice %154 {offsets = [0, 0], sizes = [2, 128], strides = [1, 1]} : vector<2x256xf32> to vector<2x128xf32>
    %158 = arith.addf %156, %157 : vector<2x128xf32>
    %159 = arith.negf %158 : vector<2x128xf32>
    %160 = math.exp %159 : vector<2x128xf32>
    %cst_43 = arith.constant 1.000000e+00 : f32
    %161 = vector.broadcast %cst_43 : f32 to vector<2x128xf32>
    %162 = arith.addf %161, %160 : vector<2x128xf32>
    %163 = arith.divf %161, %162 : vector<2x128xf32>
    %164 = vector.extract_strided_slice %153 {offsets = [0, 128], sizes = [2, 128], strides = [1, 1]} : vector<2x384xf32> to vector<2x128xf32>
    %165 = vector.extract_strided_slice %154 {offsets = [0, 128], sizes = [2, 128], strides = [1, 1]} : vector<2x256xf32> to vector<2x128xf32>
    %166 = arith.addf %164, %165 : vector<2x128xf32>
    %167 = arith.negf %166 : vector<2x128xf32>
    %168 = math.exp %167 : vector<2x128xf32>
    %cst_44 = arith.constant 1.000000e+00 : f32
    %169 = vector.broadcast %cst_44 : f32 to vector<2x128xf32>
    %170 = arith.addf %169, %168 : vector<2x128xf32>
    %171 = arith.divf %169, %170 : vector<2x128xf32>
    %172 = vector.extract_strided_slice %153 {offsets = [0, 256], sizes = [2, 128], strides = [1, 1]} : vector<2x384xf32> to vector<2x128xf32>
    %173 = vector.broadcast %15 : vector<1x128xf32> to vector<2x128xf32>
    %174 = arith.addf %155, %173 : vector<2x128xf32>
    %175 = arith.mulf %163, %174 : vector<2x128xf32>
    %176 = arith.addf %172, %175 : vector<2x128xf32>
    %177 = math.tanh %176 : vector<2x128xf32>
    %178 = arith.subf %151, %177 : vector<2x128xf32>
    %179 = arith.mulf %171, %178 : vector<2x128xf32>
    %180 = arith.addf %177, %179 : vector<2x128xf32>
    %c10 = arith.constant 10 : index
    %c0_45 = arith.constant 0 : index
    %181 = vector.load %arg8[%c10, %c0_45] : memref<16x128xf32, #tpu.memory_space<vmem>>, vector<2x128xf32>
    tpu.vector_store %arg8[%c10, %c0_45], %180 {strides = array<i32>} : memref<16x128xf32, #tpu.memory_space<vmem>>, vector<2x128xf32>,
    %182 = vector.extract_strided_slice %12 {offsets = [12, 0], sizes = [2, 384], strides = [1, 1]} : vector<16x384xf32> to vector<2x384xf32>
    %cst_46 = arith.constant dense<0.000000e+00> : vector<2x256xf32>
    %183 = tpu.matmul %180, %13, %cst_46 {dimension_numbers = #tpu.dot_dimension_numbers<[1], [0], [0], [1], [0, 0, 1, 1], [], []>} : vector<2x128xf32>, vector<128x256xf32>, vector<2x256xf32> -> vector<2x256xf32>
    %cst_47 = arith.constant dense<0.000000e+00> : vector<2x128xf32>
    %184 = tpu.matmul %180, %14, %cst_47 {dimension_numbers = #tpu.dot_dimension_numbers<[1], [0], [0], [1], [0, 0, 1, 1], [], []>} : vector<2x128xf32>, vector<128x128xf32>, vector<2x128xf32> -> vector<2x128xf32>
    %185 = vector.extract_strided_slice %182 {offsets = [0, 0], sizes = [2, 128], strides = [1, 1]} : vector<2x384xf32> to vector<2x128xf32>
    %186 = vector.extract_strided_slice %183 {offsets = [0, 0], sizes = [2, 128], strides = [1, 1]} : vector<2x256xf32> to vector<2x128xf32>
    %187 = arith.addf %185, %186 : vector<2x128xf32>
    %188 = arith.negf %187 : vector<2x128xf32>
    %189 = math.exp %188 : vector<2x128xf32>
    %cst_48 = arith.constant 1.000000e+00 : f32
    %190 = vector.broadcast %cst_48 : f32 to vector<2x128xf32>
    %191 = arith.addf %190, %189 : vector<2x128xf32>
    %192 = arith.divf %190, %191 : vector<2x128xf32>
    %193 = vector.extract_strided_slice %182 {offsets = [0, 128], sizes = [2, 128], strides = [1, 1]} : vector<2x384xf32> to vector<2x128xf32>
    %194 = vector.extract_strided_slice %183 {offsets = [0, 128], sizes = [2, 128], strides = [1, 1]} : vector<2x256xf32> to vector<2x128xf32>
    %195 = arith.addf %193, %194 : vector<2x128xf32>
    %196 = arith.negf %195 : vector<2x128xf32>
    %197 = math.exp %196 : vector<2x128xf32>
    %cst_49 = arith.constant 1.000000e+00 : f32
    %198 = vector.broadcast %cst_49 : f32 to vector<2x128xf32>
    %199 = arith.addf %198, %197 : vector<2x128xf32>
    %200 = arith.divf %198, %199 : vector<2x128xf32>
    %201 = vector.extract_strided_slice %182 {offsets = [0, 256], sizes = [2, 128], strides = [1, 1]} : vector<2x384xf32> to vector<2x128xf32>
    %202 = vector.broadcast %15 : vector<1x128xf32> to vector<2x128xf32>
    %203 = arith.addf %184, %202 : vector<2x128xf32>
    %204 = arith.mulf %192, %203 : vector<2x128xf32>
    %205 = arith.addf %201, %204 : vector<2x128xf32>
    %206 = math.tanh %205 : vector<2x128xf32>
    %207 = arith.subf %180, %206 : vector<2x128xf32>
    %208 = arith.mulf %200, %207 : vector<2x128xf32>
    %209 = arith.addf %206, %208 : vector<2x128xf32>
    %c12 = arith.constant 12 : index
    %c0_50 = arith.constant 0 : index
    %210 = vector.load %arg8[%c12, %c0_50] : memref<16x128xf32, #tpu.memory_space<vmem>>, vector<2x128xf32>
    tpu.vector_store %arg8[%c12, %c0_50], %209 {strides = array<i32>} : memref<16x128xf32, #tpu.memory_space<vmem>>, vector<2x128xf32>,
    %211 = vector.extract_strided_slice %12 {offsets = [14, 0], sizes = [2, 384], strides = [1, 1]} : vector<16x384xf32> to vector<2x384xf32>
    %cst_51 = arith.constant dense<0.000000e+00> : vector<2x256xf32>
    %212 = tpu.matmul %209, %13, %cst_51 {dimension_numbers = #tpu.dot_dimension_numbers<[1], [0], [0], [1], [0, 0, 1, 1], [], []>} : vector<2x128xf32>, vector<128x256xf32>, vector<2x256xf32> -> vector<2x256xf32>
    %cst_52 = arith.constant dense<0.000000e+00> : vector<2x128xf32>
    %213 = tpu.matmul %209, %14, %cst_52 {dimension_numbers = #tpu.dot_dimension_numbers<[1], [0], [0], [1], [0, 0, 1, 1], [], []>} : vector<2x128xf32>, vector<128x128xf32>, vector<2x128xf32> -> vector<2x128xf32>
    %214 = vector.extract_strided_slice %211 {offsets = [0, 0], sizes = [2, 128], strides = [1, 1]} : vector<2x384xf32> to vector<2x128xf32>
    %215 = vector.extract_strided_slice %212 {offsets = [0, 0], sizes = [2, 128], strides = [1, 1]} : vector<2x256xf32> to vector<2x128xf32>
    %216 = arith.addf %214, %215 : vector<2x128xf32>
    %217 = arith.negf %216 : vector<2x128xf32>
    %218 = math.exp %217 : vector<2x128xf32>
    %cst_53 = arith.constant 1.000000e+00 : f32
    %219 = vector.broadcast %cst_53 : f32 to vector<2x128xf32>
    %220 = arith.addf %219, %218 : vector<2x128xf32>
    %221 = arith.divf %219, %220 : vector<2x128xf32>
    %222 = vector.extract_strided_slice %211 {offsets = [0, 128], sizes = [2, 128], strides = [1, 1]} : vector<2x384xf32> to vector<2x128xf32>
    %223 = vector.extract_strided_slice %212 {offsets = [0, 128], sizes = [2, 128], strides = [1, 1]} : vector<2x256xf32> to vector<2x128xf32>
    %224 = arith.addf %222, %223 : vector<2x128xf32>
    %225 = arith.negf %224 : vector<2x128xf32>
    %226 = math.exp %225 : vector<2x128xf32>
    %cst_54 = arith.constant 1.000000e+00 : f32
    %227 = vector.broadcast %cst_54 : f32 to vector<2x128xf32>
    %228 = arith.addf %227, %226 : vector<2x128xf32>
    %229 = arith.divf %227, %228 : vector<2x128xf32>
    %230 = vector.extract_strided_slice %211 {offsets = [0, 256], sizes = [2, 128], strides = [1, 1]} : vector<2x384xf32> to vector<2x128xf32>
    %231 = vector.broadcast %15 : vector<1x128xf32> to vector<2x128xf32>
    %232 = arith.addf %213, %231 : vector<2x128xf32>
    %233 = arith.mulf %221, %232 : vector<2x128xf32>
    %234 = arith.addf %230, %233 : vector<2x128xf32>
    %235 = math.tanh %234 : vector<2x128xf32>
    %236 = arith.subf %209, %235 : vector<2x128xf32>
    %237 = arith.mulf %229, %236 : vector<2x128xf32>
    %238 = arith.addf %235, %237 : vector<2x128xf32>
    %c14 = arith.constant 14 : index
    %c0_55 = arith.constant 0 : index
    %239 = vector.load %arg8[%c14, %c0_55] : memref<16x128xf32, #tpu.memory_space<vmem>>, vector<2x128xf32>
    tpu.vector_store %arg8[%c14, %c0_55], %238 {strides = array<i32>} : memref<16x128xf32, #tpu.memory_space<vmem>>, vector<2x128xf32>,
    return
  }
}

</mosaic_0001>

<llo_original>
// kernel: encoder_forward.1
$region0: #{encoder_forward.1}
  #allocation0 [shape = 'u32[]', space=smem, size = 0x4, offset = 0x4, fixed_abs, tag = 'smem constant byte address 0x4 - core index']
  #allocation1 [shape = 'u32[144,128]{1,0:T(1,128)}', space=vmem, size = 0x12000, scoped, tag = 'internal scratch']
  %s0 = inlined_call_operand.vmem [shape: f32[16,4], index: 0, kind: input, shape index: {}]
  %s1 = inlined_call_operand.vmem [shape: f32[4,128], index: 1, kind: input, shape index: {}]
  %s2 = inlined_call_operand.vmem [shape: f32[1,128], index: 2, kind: input, shape index: {}]
  %s3 = inlined_call_operand.vmem [shape: f32[128,384], index: 3, kind: input, shape index: {}]
  %s4 = inlined_call_operand.vmem [shape: f32[1,384], index: 4, kind: input, shape index: {}]
  %s5 = inlined_call_operand.vmem [shape: f32[128,256], index: 5, kind: input, shape index: {}]
  %s6 = inlined_call_operand.vmem [shape: f32[128,128], index: 6, kind: input, shape index: {}]
  %s7 = inlined_call_operand.vmem [shape: f32[1,128], index: 7, kind: input, shape index: {}]
  %s8 = inlined_call_operand.vmem [shape: f32[16,128], index: 8, kind: output, shape index: {}]
  %s9 = sld [smem:[#allocation0]]
  $region42: #{encoder_forward.1} parent=0
    _
  %s11 = ssub.s32 1, %s9
  %s12 = scalar_select 0, %s11, %s9
  // Predicated region
  $region2: #{encoder_forward.1} parent=0 // pred_check
    _
  $region3: #{encoder_forward.1} parent=0 // pred_check_branch
    %14 = sbr.rel (0) target = $region5
  $region4: #{encoder_forward.1} parent=0 // pred_region
    _
  $region5: #{encoder_forward.1} parent=0 // pred_fallthru
    _
  // Predicated region
  $region6: #{encoder_forward.1} parent=0 // pred_check
    _
  $region7: #{encoder_forward.1} parent=0 // pred_check_branch
    %16 = sbr.rel (0) target = $region9
  $region8: #{encoder_forward.1} parent=0 // pred_region
    _
  $region9: #{encoder_forward.1} parent=0 // pred_fallthru
    _
  // Predicated region
  $region10: #{encoder_forward.1} parent=0 // pred_check
    _
  $region11: #{encoder_forward.1} parent=0 // pred_check_branch
    %18 = sbr.rel (0) target = $region13
  $region12: #{encoder_forward.1} parent=0 // pred_region
    _
  $region13: #{encoder_forward.1} parent=0 // pred_fallthru
    _
  // Predicated region
  $region14: #{encoder_forward.1} parent=0 // pred_check
    _
  $region15: #{encoder_forward.1} parent=0 // pred_check_branch
    %20 = sbr.rel (0) target = $region17
  $region16: #{encoder_forward.1} parent=0 // pred_region
    _
  $region17: #{encoder_forward.1} parent=0 // pred_fallthru
    _
  // Predicated region
  $region18: #{encoder_forward.1} parent=0 // pred_check
    _
  $region19: #{encoder_forward.1} parent=0 // pred_check_branch
    %22 = sbr.rel (0) target = $region21
  $region20: #{encoder_forward.1} parent=0 // pred_region
    _
  $region21: #{encoder_forward.1} parent=0 // pred_fallthru
    _
  // Predicated region
  $region22: #{encoder_forward.1} parent=0 // pred_check
    _
  $region23: #{encoder_forward.1} parent=0 // pred_check_branch
    %24 = sbr.rel (0) target = $region25
  $region24: #{encoder_forward.1} parent=0 // pred_region
    _
  $region25: #{encoder_forward.1} parent=0 // pred_fallthru
    _
  // Predicated region
  $region26: #{encoder_forward.1} parent=0 // pred_check
    _
  $region27: #{encoder_forward.1} parent=0 // pred_check_branch
    %26 = sbr.rel (0) target = $region29
  $region28: #{encoder_forward.1} parent=0 // pred_region
    _
  $region29: #{encoder_forward.1} parent=0 // pred_fallthru
    _
  // Predicated region
  $region30: #{encoder_forward.1} parent=0 // pred_check
    _
  $region31: #{encoder_forward.1} parent=0 // pred_check_branch
    %28 = sbr.rel (0) target = $region33
  $region32: #{encoder_forward.1} parent=0 // pred_region
    _
  $region33: #{encoder_forward.1} parent=0 // pred_fallthru
    _
  %v29 = vld [vmem:[%s0] sm:$0xff]
  %v30 = vld [vmem:[%s0 + $0x8] sm:$0xff]
  %v31 = vld [vmem:[%s1] sm:$0xf]
  %v32 = vld [vmem:[%s2] sm:$0x1]
  %v34 = vlaneseq
  %v35 = vshrl.u32 %v34, 7
  %v36 = vsub.s32 0, %v35
  %v37 = vrot.slane %v32, %v36
  %vm39 = vcmask 31744
  %v41 = vsel %vm39, %v29, 0
  %v44 = vsel %vm39, %v30, 0
  %vm46 = vcmask 1043456
  %v48 = vsel %vm46, %v31, 0
  %50 = vmatprep.subr.mxu0 0.0
  %51 = vmatpush1.msra.mxu0 %v48
  %52 = vmatprep.subr.mxu0 0.0
  %53 = vmatpush1.msra.mxu0 0.0
  %54 = vmatprep.subr.mxu0 0.0
  %55 = vmatpush1.msra.mxu0 0.0
  %56 = vmatprep.subr.mxu0 0.0
  %57 = vmatpush1.msra.mxu0 0.0
  %58 = vmatprep.subr.mxu0 0.0
  %59 = vmatpush1.msra.mxu0 0.0
  %60 = vmatprep.subr.mxu0 0.0
  %61 = vmatpush1.msra.mxu0 0.0
  %62 = vmatprep.subr.mxu0 0.0
  %63 = vmatpush1.msra.mxu0 0.0
  %64 = vmatprep.subr.mxu0 0.0
  %65 = vmatpush1.msra.mxu0 0.0
  %66 = vmatprep.subr.mxu0 0.0
  %67 = vmatpush1.msra.mxu0 0.0
  %68 = vmatprep.subr.mxu0 0.0
  %69 = vmatpush1.msra.mxu0 0.0
  %70 = vmatprep.subr.mxu0 0.0
  %71 = vmatpush1.msra.mxu0 0.0
  %72 = vmatprep.subr.mxu0 0.0
  %73 = vmatpush1.msra.mxu0 0.0
  %74 = vmatprep.subr.mxu0 0.0
  %75 = vmatpush1.msra.mxu0 0.0
  %76 = vmatprep.subr.mxu0 0.0
  %77 = vmatpush1.msra.mxu0 0.0
  %78 = vmatprep.subr.mxu0 0.0
  %79 = vmatpush1.msra.mxu0 0.0
  %80 = vmatprep.subr.mxu0 0.0
  %81 = vmatpush1.msra.mxu0 0.0
  %82 = vmatprep.subr.mxu0 0.0
  %83 = vmatpush1.msra.mxu0 0.0
  %84 = vmatprep.subr.mxu0 0.0
  %85 = vmatpush1.msra.mxu0 0.0
  %86 = vmatprep.subr.mxu0 0.0
  %87 = vmatpush1.msra.mxu0 0.0
  %88 = vmatprep.subr.mxu0 0.0
  %89 = vmatpush1.msra.mxu0 0.0
  %90 = vmatprep.subr.mxu0 0.0
  %91 = vmatpush1.msra.mxu0 0.0
  %92 = vmatprep.subr.mxu0 0.0
  %93 = vmatpush1.msra.mxu0 0.0
  %94 = vmatprep.subr.mxu0 0.0
  %95 = vmatpush1.msra.mxu0 0.0
  %96 = vmatprep.subr.mxu0 0.0
  %97 = vmatpush1.msra.mxu0 0.0
  %98 = vmatprep.subr.mxu0 0.0
  %99 = vmatpush1.msra.mxu0 0.0
  %100 = vmatprep.subr.mxu0 0.0
  %101 = vmatpush1.msra.mxu0 0.0
  %102 = vmatprep.subr.mxu0 0.0
  %103 = vmatpush1.msra.mxu0 0.0
  %104 = vmatprep.subr.mxu0 0.0
  %105 = vmatpush1.msra.mxu0 0.0
  %106 = vmatprep.subr.mxu0 0.0
  %107 = vmatpush1.msra.mxu0 0.0
  %108 = vmatprep.subr.mxu0 0.0
  %109 = vmatpush1.msra.mxu0 0.0
  %110 = vmatprep.subr.mxu0 0.0
  %111 = vmatpush1.msra.mxu0 0.0
  %112 = vmatprep.subr.mxu0 0.0
  %113 = vmatpush1.msra.mxu0 0.0
  %114 = vmatprep.mubr.f32.mxu0 0.0
  %115 = vmatmul.mubr.f32.gmra.mrb[0].mxu0 %v41
  %v116 = vpop.f32.mrb[0].mxu0
  %v117 = vadd.f32 %v37, %v116
  %v118 = vpop.f32.mrb[0].mxu0
  %119 = vmatprep.mubr.f32.mxu0 0.0
  %120 = vmatmul.mubr.f32.gmra.mrb[0].mxu0 %v44
  %v121 = vpop.f32.mrb[0].mxu0
  %v122 = vadd.f32 %v37, %v121
  %v123 = vpop.f32.mrb[0].mxu0
  %124 = vdwg.mxu0
  %v125 = vmax.f32 %v117, 0.0
  %v126 = vmax.f32 %v122, 0.0
  %v127 = vld [vmem:[%s3] sm:$0xff]
  %v128 = vld [vmem:[%s3 + $0x8] sm:$0xff]
  %v129 = vld [vmem:[%s3 + $0x10] sm:$0xff]
  %v130 = vld [vmem:[%s3 + $0x18] sm:$0xff]
  %v131 = vld [vmem:[%s3 + $0x20] sm:$0xff]
  %v132 = vld [vmem:[%s3 + $0x28] sm:$0xff]
  %v133 = vld [vmem:[%s3 + $0x30] sm:$0xff]
  %v134 = vld [vmem:[%s3 + $0x38] sm:$0xff]
  %v135 = vld [vmem:[%s3 + $0x40] sm:$0xff]
  %v136 = vld [vmem:[%s3 + $0x48] sm:$0xff]
  %v137 = vld [vmem:[%s3 + $0x50] sm:$0xff]
  %v138 = vld [vmem:[%s3 + $0x58] sm:$0xff]
  %v139 = vld [vmem:[%s3 + $0x60] sm:$0xff]
  %v140 = vld [vmem:[%s3 + $0x68] sm:$0xff]
  %v141 = vld [vmem:[%s3 + $0x70] sm:$0xff]
  %v142 = vld [vmem:[%s3 + $0x78] sm:$0xff]
  %v143 = vld [vmem:[%s3 + $0x80] sm:$0xff]
  %v144 = vld [vmem:[%s3 + $0x88] sm:$0xff]
  %v145 = vld [vmem:[%s3 + $0x90] sm:$0xff]
  %v146 = vld [vmem:[%s3 + $0x98] sm:$0xff]
  %v147 = vld [vmem:[%s3 + $0xa0] sm:$0xff]
  %v148 = vld [vmem:[%s3 + $0xa8] sm:$0xff]
  %v149 = vld [vmem:[%s3 + $0xb0] sm:$0xff]
  %v150 = vld [vmem:[%s3 + $0xb8] sm:$0xff]
  %v151 = vld [vmem:[%s3 + $0xc0] sm:$0xff]
  %v152 = vld [vmem:[%s3 + $0xc8] sm:$0xff]
  %v153 = vld [vmem:[%s3 + $0xd0] sm:$0xff]
  %v154 = vld [vmem:[%s3 + $0xd8] sm:$0xff]
  %v155 = vld [vmem:[%s3 + $0xe0] sm:$0xff]
  %v156 = vld [vmem:[%s3 + $0xe8] sm:$0xff]
  %v157 = vld [vmem:[%s3 + $0xf0] sm:$0xff]
  %v158 = vld [vmem:[%s3 + $0xf8] sm:$0xff]
  %v159 = vld [vmem:[%s3 + $0x100] sm:$0xff]
  %v160 = vld [vmem:[%s3 + $0x108] sm:$0xff]
  %v161 = vld [vmem:[%s3 + $0x110] sm:$0xff]
  %v162 = vld [vmem:[%s3 + $0x118] sm:$0xff]
  %v163 = vld [vmem:[%s3 + $0x120] sm:$0xff]
  %v164 = vld [vmem:[%s3 + $0x128] sm:$0xff]
  %v165 = vld [vmem:[%s3 + $0x130] sm:$0xff]
  %v166 = vld [vmem:[%s3 + $0x138] sm:$0xff]
  %v167 = vld [vmem:[%s3 + $0x140] sm:$0xff]
  %v168 = vld [vmem:[%s3 + $0x148] sm:$0xff]
  %v169 = vld [vmem:[%s3 + $0x150] sm:$0xff]
  %v170 = vld [vmem:[%s3 + $0x158] sm:$0xff]
  %v171 = vld [vmem:[%s3 + $0x160] sm:$0xff]
  %v172 = vld [vmem:[%s3 + $0x168] sm:$0xff]
  %v173 = vld [vmem:[%s3 + $0x170] sm:$0xff]
  %v174 = vld [vmem:[%s3 + $0x178] sm:$0xff]
  %v175 = vld [vmem:[%s4] sm:$0x7]
  %v177 = vlaneseq
  %v178 = vshrl.u32 %v177, 7
  %v179 = vsub.s32 0, %v178
  %v180 = vrot.slane %v175, %v179
  %v181 = vlaneseq
  %v182 = vshrl.u32 %v181, 7
  %v183 = vsub.s32 1, %v182
  %v184 = vrot.slane %v175, %v183
  %v185 = vlaneseq
  %v186 = vshrl.u32 %v185, 7
  %v187 = vsub.s32 2, %v186
  %v188 = vrot.slane %v175, %v187
  %192 = vmatprep.subr.mxu0 %v128
  %193 = vmatpush1.msra.mxu0 %v127
  %194 = vmatprep.subr.mxu0 %v131
  %195 = vmatpush1.msra.mxu0 %v130
  %196 = vmatprep.subr.mxu0 %v134
  %197 = vmatpush1.msra.mxu0 %v133
  %198 = vmatprep.subr.mxu0 %v137
  %199 = vmatpush1.msra.mxu0 %v136
  %200 = vmatprep.subr.mxu0 %v140
  %201 = vmatpush1.msra.mxu0 %v139
  %202 = vmatprep.subr.mxu0 %v143
  %203 = vmatpush1.msra.mxu0 %v142
  %204 = vmatprep.subr.mxu0 %v146
  %205 = vmatpush1.msra.mxu0 %v145
  %206 = vmatprep.subr.mxu0 %v149
  %207 = vmatpush1.msra.mxu0 %v148
  %208 = vmatprep.subr.mxu0 %v152
  %209 = vmatpush1.msra.mxu0 %v151
  %210 = vmatprep.subr.mxu0 %v155
  %211 = vmatpush1.msra.mxu0 %v154
  %212 = vmatprep.subr.mxu0 %v158
  %213 = vmatpush1.msra.mxu0 %v157
  %214 = vmatprep.subr.mxu0 %v161
  %215 = vmatpush1.msra.mxu0 %v160
  %216 = vmatprep.subr.mxu0 %v164
  %217 = vmatpush1.msra.mxu0 %v163
  %218 = vmatprep.subr.mxu0 %v167
  %219 = vmatpush1.msra.mxu0 %v166
  %220 = vmatprep.subr.mxu0 %v170
  %221 = vmatpush1.msra.mxu0 %v169
  %222 = vmatprep.subr.mxu0 %v173
  %223 = vmatpush1.msra.mxu0 %v172
  %224 = vmatprep.subr.mxu0 0.0
  %225 = vmatpush1.msra.mxu0 0.0
  %226 = vmatprep.subr.mxu0 0.0
  %227 = vmatpush1.msra.mxu0 0.0
  %228 = vmatprep.subr.mxu0 0.0
  %229 = vmatpush1.msra.mxu0 0.0
  %230 = vmatprep.subr.mxu0 0.0
  %231 = vmatpush1.msra.mxu0 0.0
  %232 = vmatprep.subr.mxu0 0.0
  %233 = vmatpush1.msra.mxu0 0.0
  %234 = vmatprep.subr.mxu0 0.0
  %235 = vmatpush1.msra.mxu0 0.0
  %236 = vmatprep.subr.mxu0 0.0
  %237 = vmatpush1.msra.mxu0 0.0
  %238 = vmatprep.subr.mxu0 0.0
  %239 = vmatpush1.msra.mxu0 0.0
  %240 = vmatprep.subr.mxu0 0.0
  %241 = vmatpush1.msra.mxu0 0.0
  %242 = vmatprep.subr.mxu0 0.0
  %243 = vmatpush1.msra.mxu0 0.0
  %244 = vmatprep.subr.mxu0 0.0
  %245 = vmatpush1.msra.mxu0 0.0
  %246 = vmatprep.subr.mxu0 0.0
  %247 = vmatpush1.msra.mxu0 0.0
  %248 = vmatprep.subr.mxu0 0.0
  %249 = vmatpush1.msra.mxu0 0.0
  %250 = vmatprep.subr.mxu0 0.0
  %251 = vmatpush1.msra.mxu0 0.0
  %252 = vmatprep.subr.mxu0 0.0
  %253 = vmatpush1.msra.mxu0 0.0
  %254 = vmatprep.subr.mxu0 0.0
  %255 = vmatpush1.msra.mxu0 0.0
  %256 = vmatprep.mubr.f32.mxu0 0.0
  %257 = vmatmul.mubr.f32.gmra.mrb[0].mxu0 %v125
  %v258 = vpop.f32.mrb[0].mxu0
  %v259 = vadd.f32 %v180, %v258
  %v260 = vpop.f32.mrb[0].mxu0
  %v261 = vadd.f32 %v184, %v260
  %262 = vmatprep.mubr.f32.mxu0 0.0
  %263 = vmatmul.mubr.f32.gmra.mrb[0].mxu0 %v126
  %v264 = vpop.f32.mrb[0].mxu0
  %v265 = vadd.f32 %v180, %v264
  %v266 = vpop.f32.mrb[0].mxu0
  %v267 = vadd.f32 %v184, %v266
  %268 = vdwg.mxu0
  %269 = vmatprep.subr.mxu0 0.0
  %270 = vmatpush1.msra.mxu0 %v129
  %271 = vmatprep.subr.mxu0 0.0
  %272 = vmatpush1.msra.mxu0 %v132
  %273 = vmatprep.subr.mxu0 0.0
  %274 = vmatpush1.msra.mxu0 %v135
  %275 = vmatprep.subr.mxu0 0.0
  %276 = vmatpush1.msra.mxu0 %v138
  %277 = vmatprep.subr.mxu0 0.0
  %278 = vmatpush1.msra.mxu0 %v141
  %279 = vmatprep.subr.mxu0 0.0
  %280 = vmatpush1.msra.mxu0 %v144
  %281 = vmatprep.subr.mxu0 0.0
  %282 = vmatpush1.msra.mxu0 %v147
  %283 = vmatprep.subr.mxu0 0.0
  %284 = vmatpush1.msra.mxu0 %v150
  %285 = vmatprep.subr.mxu0 0.0
  %286 = vmatpush1.msra.mxu0 %v153
  %287 = vmatprep.subr.mxu0 0.0
  %288 = vmatpush1.msra.mxu0 %v156
  %289 = vmatprep.subr.mxu0 0.0
  %290 = vmatpush1.msra.mxu0 %v159
  %291 = vmatprep.subr.mxu0 0.0
  %292 = vmatpush1.msra.mxu0 %v162
  %293 = vmatprep.subr.mxu0 0.0
  %294 = vmatpush1.msra.mxu0 %v165
  %295 = vmatprep.subr.mxu0 0.0
  %296 = vmatpush1.msra.mxu0 %v168
  %297 = vmatprep.subr.mxu0 0.0
  %298 = vmatpush1.msra.mxu0 %v171
  %299 = vmatprep.subr.mxu0 0.0
  %300 = vmatpush1.msra.mxu0 %v174
  %301 = vmatprep.subr.mxu0 0.0
  %302 = vmatpush1.msra.mxu0 0.0
  %303 = vmatprep.subr.mxu0 0.0
  %304 = vmatpush1.msra.mxu0 0.0
  %305 = vmatprep.subr.mxu0 0.0
  %306 = vmatpush1.msra.mxu0 0.0
  %307 = vmatprep.subr.mxu0 0.0
  %308 = vmatpush1.msra.mxu0 0.0
  %309 = vmatprep.subr.mxu0 0.0
  %310 = vmatpush1.msra.mxu0 0.0
  %311 = vmatprep.subr.mxu0 0.0
  %312 = vmatpush1.msra.mxu0 0.0
  %313 = vmatprep.subr.mxu0 0.0
  %314 = vmatpush1.msra.mxu0 0.0
  %315 = vmatprep.subr.mxu0 0.0
  %316 = vmatpush1.msra.mxu0 0.0
  %317 = vmatprep.subr.mxu0 0.0
  %318 = vmatpush1.msra.mxu0 0.0
  %319 = vmatprep.subr.mxu0 0.0
  %320 = vmatpush1.msra.mxu0 0.0
  %321 = vmatprep.subr.mxu0 0.0
  %322 = vmatpush1.msra.mxu0 0.0
  %323 = vmatprep.subr.mxu0 0.0
  %324 = vmatpush1.msra.mxu0 0.0
  %325 = vmatprep.subr.mxu0 0.0
  %326 = vmatpush1.msra.mxu0 0.0
  %327 = vmatprep.subr.mxu0 0.0
  %328 = vmatpush1.msra.mxu0 0.0
  %329 = vmatprep.subr.mxu0 0.0
  %330 = vmatpush1.msra.mxu0 0.0
  %331 = vmatprep.subr.mxu0 0.0
  %332 = vmatpush1.msra.mxu0 0.0
  %333 = vmatprep.mubr.f32.mxu0 0.0
  %334 = vmatmul.mubr.f32.gmra.mrb[0].mxu0 %v125
  %v335 = vpop.f32.mrb[0].mxu0
  %v336 = vadd.f32 %v188, %v335
  %v337 = vpop.f32.mrb[0].mxu0
  %338 = vmatprep.mubr.f32.mxu0 0.0
  %339 = vmatmul.mubr.f32.gmra.mrb[0].mxu0 %v126
  %v340 = vpop.f32.mrb[0].mxu0
  %v341 = vadd.f32 %v188, %v340
  %v342 = vpop.f32.mrb[0].mxu0
  %343 = vdwg.mxu0
  %v344 = vld [vmem:[%s5] sm:$0xff]
  %v345 = vld [vmem:[%s5 + $0x8] sm:$0xff]
  %v346 = vld [vmem:[%s5 + $0x10] sm:$0xff]
  %v347 = vld [vmem:[%s5 + $0x18] sm:$0xff]
  %v348 = vld [vmem:[%s5 + $0x20] sm:$0xff]
  %v349 = vld [vmem:[%s5 + $0x28] sm:$0xff]
  %v350 = vld [vmem:[%s5 + $0x30] sm:$0xff]
  %v351 = vld [vmem:[%s5 + $0x38] sm:$0xff]
  %v352 = vld [vmem:[%s5 + $0x40] sm:$0xff]
  %v353 = vld [vmem:[%s5 + $0x48] sm:$0xff]
  %v354 = vld [vmem:[%s5 + $0x50] sm:$0xff]
  %v355 = vld [vmem:[%s5 + $0x58] sm:$0xff]
  %v356 = vld [vmem:[%s5 + $0x60] sm:$0xff]
  %v357 = vld [vmem:[%s5 + $0x68] sm:$0xff]
  %v358 = vld [vmem:[%s5 + $0x70] sm:$0xff]
  %v359 = vld [vmem:[%s5 + $0x78] sm:$0xff]
  %v360 = vld [vmem:[%s5 + $0x80] sm:$0xff]
  %v361 = vld [vmem:[%s5 + $0x88] sm:$0xff]
  %v362 = vld [vmem:[%s5 + $0x90] sm:$0xff]
  %v363 = vld [vmem:[%s5 + $0x98] sm:$0xff]
  %v364 = vld [vmem:[%s5 + $0xa0] sm:$0xff]
  %v365 = vld [vmem:[%s5 + $0xa8] sm:$0xff]
  %v366 = vld [vmem:[%s5 + $0xb0] sm:$0xff]
  %v367 = vld [vmem:[%s5 + $0xb8] sm:$0xff]
  %v368 = vld [vmem:[%s5 + $0xc0] sm:$0xff]
  %v369 = vld [vmem:[%s5 + $0xc8] sm:$0xff]
  %v370 = vld [vmem:[%s5 + $0xd0] sm:$0xff]
  %v371 = vld [vmem:[%s5 + $0xd8] sm:$0xff]
  %v372 = vld [vmem:[%s5 + $0xe0] sm:$0xff]
  %v373 = vld [vmem:[%s5 + $0xe8] sm:$0xff]
  %v374 = vld [vmem:[%s5 + $0xf0] sm:$0xff]
  %v375 = vld [vmem:[%s5 + $0xf8] sm:$0xff]
  %v376 = vld [vmem:[%s6] sm:$0xff]
  %v377 = vld [vmem:[%s6 + $0x8] sm:$0xff]
  %v378 = vld [vmem:[%s6 + $0x10] sm:$0xff]
  %v379 = vld [vmem:[%s6 + $0x18] sm:$0xff]
  %v380 = vld [vmem:[%s6 + $0x20] sm:$0xff]
  %v381 = vld [vmem:[%s6 + $0x28] sm:$0xff]
  %v382 = vld [vmem:[%s6 + $0x30] sm:$0xff]
  %v383 = vld [vmem:[%s6 + $0x38] sm:$0xff]
  %v384 = vld [vmem:[%s6 + $0x40] sm:$0xff]
  %v385 = vld [vmem:[%s6 + $0x48] sm:$0xff]
  %v386 = vld [vmem:[%s6 + $0x50] sm:$0xff]
  %v387 = vld [vmem:[%s6 + $0x58] sm:$0xff]
  %v388 = vld [vmem:[%s6 + $0x60] sm:$0xff]
  %v389 = vld [vmem:[%s6 + $0x68] sm:$0xff]
  %v390 = vld [vmem:[%s6 + $0x70] sm:$0xff]
  %v391 = vld [vmem:[%s6 + $0x78] sm:$0xff]
  %v392 = vld [vmem:[%s7] sm:$0x1]
  %v393 = vxor.u32 %v259, 2147483648
  %v394 = vmul.f32 %v393, 1.442695
  %v395 = vpow.pop %v394
  %v396 = vadd.f32 %v395, 1.0
  %v397 = vrcp.pop %v396
  %v398 = vmul.f32 1.0, %v397
  %v399 = vxor.u32 %v261, 2147483648
  %v400 = vmul.f32 %v399, 1.442695
  %v401 = vpow.pop %v400
  %v402 = vadd.f32 %v401, 1.0
  %v403 = vrcp.pop %v402
  %v404 = vmul.f32 1.0, %v403
  %v406 = vlaneseq
  %v407 = vshrl.u32 %v406, 7
  %v408 = vsub.s32 0, %v407
  %v409 = vrot.slane %v392, %v408
  %v411 = vmul.f32 %v398, %v409
  %v412 = vadd.f32 %v336, %v411
  %v413 = vtanh.pop %v412
  %v414 = vmul.f32 %v404, %v413
  %v415 = vsub.f32 %v413, %v414
  %416 = vst [vmem:[%s8] sm:$0x3] %v415
  %417 = vmatprep.subr.mxu0 %v345
  %418 = vmatpush1.msra.mxu0 %v344
  %419 = vmatprep.subr.mxu0 %v347
  %420 = vmatpush1.msra.mxu0 %v346
  %421 = vmatprep.subr.mxu0 %v349
  %422 = vmatpush1.msra.mxu0 %v348
  %423 = vmatprep.subr.mxu0 %v351
  %424 = vmatpush1.msra.mxu0 %v350
  %425 = vmatprep.subr.mxu0 %v353
  %426 = vmatpush1.msra.mxu0 %v352
  %427 = vmatprep.subr.mxu0 %v355
  %428 = vmatpush1.msra.mxu0 %v354
  %429 = vmatprep.subr.mxu0 %v357
  %430 = vmatpush1.msra.mxu0 %v356
  %431 = vmatprep.subr.mxu0 %v359
  %432 = vmatpush1.msra.mxu0 %v358
  %433 = vmatprep.subr.mxu0 %v361
  %434 = vmatpush1.msra.mxu0 %v360
  %435 = vmatprep.subr.mxu0 %v363
  %436 = vmatpush1.msra.mxu0 %v362
  %437 = vmatprep.subr.mxu0 %v365
  %438 = vmatpush1.msra.mxu0 %v364
  %439 = vmatprep.subr.mxu0 %v367
  %440 = vmatpush1.msra.mxu0 %v366
  %441 = vmatprep.subr.mxu0 %v369
  %442 = vmatpush1.msra.mxu0 %v368
  %443 = vmatprep.subr.mxu0 %v371
  %444 = vmatpush1.msra.mxu0 %v370
  %445 = vmatprep.subr.mxu0 %v373
  %446 = vmatpush1.msra.mxu0 %v372
  %447 = vmatprep.subr.mxu0 %v375
  %448 = vmatpush1.msra.mxu0 %v374
  %449 = vmatprep.subr.mxu0 0.0
  %450 = vmatpush1.msra.mxu0 0.0
  %451 = vmatprep.subr.mxu0 0.0
  %452 = vmatpush1.msra.mxu0 0.0
  %453 = vmatprep.subr.mxu0 0.0
  %454 = vmatpush1.msra.mxu0 0.0
  %455 = vmatprep.subr.mxu0 0.0
  %456 = vmatpush1.msra.mxu0 0.0
  %457 = vmatprep.subr.mxu0 0.0
  %458 = vmatpush1.msra.mxu0 0.0
  %459 = vmatprep.subr.mxu0 0.0
  %460 = vmatpush1.msra.mxu0 0.0
  %461 = vmatprep.subr.mxu0 0.0
  %462 = vmatpush1.msra.mxu0 0.0
  %463 = vmatprep.subr.mxu0 0.0
  %464 = vmatpush1.msra.mxu0 0.0
  %465 = vmatprep.subr.mxu0 0.0
  %466 = vmatpush1.msra.mxu0 0.0
  %467 = vmatprep.subr.mxu0 0.0
  %468 = vmatpush1.msra.mxu0 0.0
  %469 = vmatprep.subr.mxu0 0.0
  %470 = vmatpush1.msra.mxu0 0.0
  %471 = vmatprep.subr.mxu0 0.0
  %472 = vmatpush1.msra.mxu0 0.0
  %473 = vmatprep.subr.mxu0 0.0
  %474 = vmatpush1.msra.mxu0 0.0
  %475 = vmatprep.subr.mxu0 0.0
  %476 = vmatpush1.msra.mxu0 0.0
  %477 = vmatprep.subr.mxu0 0.0
  %478 = vmatpush1.msra.mxu0 0.0
  %479 = vmatprep.subr.mxu0 0.0
  %480 = vmatpush1.msra.mxu0 0.0
  %481 = vmatprep.mubr.f32.mxu0 0.0
  %482 = vmatmul.mubr.f32.gmra.mrb[0].mxu0 %v415
  %v483 = vpop.f32.mrb[0].mxu0
  %v484 = vadd.f32 0.0, %v483
  %v485 = vpop.f32.mrb[0].mxu0
  %v486 = vadd.f32 0.0, %v485
  %487 = vdwg.mxu0
  %v489 = vrot.slane %v484, 6
  %v491 = vadd.f32 %v259, %v489
  %v492 = vxor.u32 %v491, 2147483648
  %v493 = vmul.f32 %v492, 1.442695
  %v494 = vpow.pop %v493
  %v495 = vadd.f32 %v494, 1.0
  %v496 = vrcp.pop %v495
  %v497 = vmul.f32 1.0, %v496
  %v499 = vrot.slane %v486, 6
  %v501 = vadd.f32 %v261, %v499
  %v502 = vxor.u32 %v501, 2147483648
  %v503 = vmul.f32 %v502, 1.442695
  %v504 = vpow.pop %v503
  %v505 = vadd.f32 %v504, 1.0
  %v506 = vrcp.pop %v505
  %v507 = vmul.f32 1.0, %v506
  %508 = vmatprep.subr.mxu0 0.0
  %509 = vmatpush1.msra.mxu0 %v376
  %510 = vmatprep.subr.mxu0 0.0
  %511 = vmatpush1.msra.mxu0 %v377
  %512 = vmatprep.subr.mxu0 0.0
  %513 = vmatpush1.msra.mxu0 %v378
  %514 = vmatprep.subr.mxu0 0.0
  %515 = vmatpush1.msra.mxu0 %v379
  %516 = vmatprep.subr.mxu0 0.0
  %517 = vmatpush1.msra.mxu0 %v380
  %518 = vmatprep.subr.mxu0 0.0
  %519 = vmatpush1.msra.mxu0 %v381
  %520 = vmatprep.subr.mxu0 0.0
  %521 = vmatpush1.msra.mxu0 %v382
  %522 = vmatprep.subr.mxu0 0.0
  %523 = vmatpush1.msra.mxu0 %v383
  %524 = vmatprep.subr.mxu0 0.0
  %525 = vmatpush1.msra.mxu0 %v384
  %526 = vmatprep.subr.mxu0 0.0
  %527 = vmatpush1.msra.mxu0 %v385
  %528 = vmatprep.subr.mxu0 0.0
  %529 = vmatpush1.msra.mxu0 %v386
  %530 = vmatprep.subr.mxu0 0.0
  %531 = vmatpush1.msra.mxu0 %v387
  %532 = vmatprep.subr.mxu0 0.0
  %533 = vmatpush1.msra.mxu0 %v388
  %534 = vmatprep.subr.mxu0 0.0
  %535 = vmatpush1.msra.mxu0 %v389
  %536 = vmatprep.subr.mxu0 0.0
  %537 = vmatpush1.msra.mxu0 %v390
  %538 = vmatprep.subr.mxu0 0.0
  %539 = vmatpush1.msra.mxu0 %v391
  %540 = vmatprep.subr.mxu0 0.0
  %541 = vmatpush1.msra.mxu0 0.0
  %542 = vmatprep.subr.mxu0 0.0
  %543 = vmatpush1.msra.mxu0 0.0
  %544 = vmatprep.subr.mxu0 0.0
  %545 = vmatpush1.msra.mxu0 0.0
  %546 = vmatprep.subr.mxu0 0.0
  %547 = vmatpush1.msra.mxu0 0.0
  %548 = vmatprep.subr.mxu0 0.0
  %549 = vmatpush1.msra.mxu0 0.0
  %550 = vmatprep.subr.mxu0 0.0
  %551 = vmatpush1.msra.mxu0 0.0
  %552 = vmatprep.subr.mxu0 0.0
  %553 = vmatpush1.msra.mxu0 0.0
  %554 = vmatprep.subr.mxu0 0.0
  %555 = vmatpush1.msra.mxu0 0.0
  %556 = vmatprep.subr.mxu0 0.0
  %557 = vmatpush1.msra.mxu0 0.0
  %558 = vmatprep.subr.mxu0 0.0
  %559 = vmatpush1.msra.mxu0 0.0
  %560 = vmatprep.subr.mxu0 0.0
  %561 = vmatpush1.msra.mxu0 0.0
  %562 = vmatprep.subr.mxu0 0.0
  %563 = vmatpush1.msra.mxu0 0.0
  %564 = vmatprep.subr.mxu0 0.0
  %565 = vmatpush1.msra.mxu0 0.0
  %566 = vmatprep.subr.mxu0 0.0
  %567 = vmatpush1.msra.mxu0 0.0
  %568 = vmatprep.subr.mxu0 0.0
  %569 = vmatpush1.msra.mxu0 0.0
  %570 = vmatprep.subr.mxu0 0.0
  %571 = vmatpush1.msra.mxu0 0.0
  %572 = vmatprep.mubr.f32.mxu0 0.0
  %573 = vmatmul.mubr.f32.gmra.mrb[0].mxu0 %v415
  %v574 = vpop.f32.mrb[0].mxu0
  %v575 = vadd.f32 %v409, %v574
  %v576 = vpop.f32.mrb[0].mxu0
  %577 = vdwg.mxu0
  %v579 = vrot.slane %v575, 6
  %v581 = vmul.f32 %v497, %v579
  %v582 = vadd.f32 %v336, %v581
  %v583 = vtanh.pop %v582
  %v585 = vrot.slane %v583, 2
  %v587 = vsub.f32 %v415, %v585
  %v589 = vrot.slane %v587, 6
  %v591 = vmul.f32 %v507, %v589
  %v592 = vadd.f32 %v583, %v591
  %593 = vst [vmem:[%s8] sm:$0xc] %v592
  %v595 = vrot.slane %v592, 2
  %597 = vmatprep.subr.mxu0 %v345
  %598 = vmatpush1.msra.mxu0 %v344
  %599 = vmatprep.subr.mxu0 %v347
  %600 = vmatpush1.msra.mxu0 %v346
  %601 = vmatprep.subr.mxu0 %v349
  %602 = vmatpush1.msra.mxu0 %v348
  %603 = vmatprep.subr.mxu0 %v351
  %604 = vmatpush1.msra.mxu0 %v350
  %605 = vmatprep.subr.mxu0 %v353
  %606 = vmatpush1.msra.mxu0 %v352
  %607 = vmatprep.subr.mxu0 %v355
  %608 = vmatpush1.msra.mxu0 %v354
  %609 = vmatprep.subr.mxu0 %v357
  %610 = vmatpush1.msra.mxu0 %v356
  %611 = vmatprep.subr.mxu0 %v359
  %612 = vmatpush1.msra.mxu0 %v358
  %613 = vmatprep.subr.mxu0 %v361
  %614 = vmatpush1.msra.mxu0 %v360
  %615 = vmatprep.subr.mxu0 %v363
  %616 = vmatpush1.msra.mxu0 %v362
  %617 = vmatprep.subr.mxu0 %v365
  %618 = vmatpush1.msra.mxu0 %v364
  %619 = vmatprep.subr.mxu0 %v367
  %620 = vmatpush1.msra.mxu0 %v366
  %621 = vmatprep.subr.mxu0 %v369
  %622 = vmatpush1.msra.mxu0 %v368
  %623 = vmatprep.subr.mxu0 %v371
  %624 = vmatpush1.msra.mxu0 %v370
  %625 = vmatprep.subr.mxu0 %v373
  %626 = vmatpush1.msra.mxu0 %v372
  %627 = vmatprep.subr.mxu0 %v375
  %628 = vmatpush1.msra.mxu0 %v374
  %629 = vmatprep.subr.mxu0 0.0
  %630 = vmatpush1.msra.mxu0 0.0
  %631 = vmatprep.subr.mxu0 0.0
  %632 = vmatpush1.msra.mxu0 0.0
  %633 = vmatprep.subr.mxu0 0.0
  %634 = vmatpush1.msra.mxu0 0.0
  %635 = vmatprep.subr.mxu0 0.0
  %636 = vmatpush1.msra.mxu0 0.0
  %637 = vmatprep.subr.mxu0 0.0
  %638 = vmatpush1.msra.mxu0 0.0
  %639 = vmatprep.subr.mxu0 0.0
  %640 = vmatpush1.msra.mxu0 0.0
  %641 = vmatprep.subr.mxu0 0.0
  %642 = vmatpush1.msra.mxu0 0.0
  %643 = vmatprep.subr.mxu0 0.0
  %644 = vmatpush1.msra.mxu0 0.0
  %645 = vmatprep.subr.mxu0 0.0
  %646 = vmatpush1.msra.mxu0 0.0
  %647 = vmatprep.subr.mxu0 0.0
  %648 = vmatpush1.msra.mxu0 0.0
  %649 = vmatprep.subr.mxu0 0.0
  %650 = vmatpush1.msra.mxu0 0.0
  %651 = vmatprep.subr.mxu0 0.0
  %652 = vmatpush1.msra.mxu0 0.0
  %653 = vmatprep.subr.mxu0 0.0
  %654 = vmatpush1.msra.mxu0 0.0
  %655 = vmatprep.subr.mxu0 0.0
  %656 = vmatpush1.msra.mxu0 0.0
  %657 = vmatprep.subr.mxu0 0.0
  %658 = vmatpush1.msra.mxu0 0.0
  %659 = vmatprep.subr.mxu0 0.0
  %660 = vmatpush1.msra.mxu0 0.0
  %661 = vmatprep.mubr.f32.mxu0 0.0
  %662 = vmatmul.mubr.f32.gmra.mrb[0].mxu0 %v595
  %v663 = vpop.f32.mrb[0].mxu0
  %v664 = vadd.f32 0.0, %v663
  %v665 = vpop.f32.mrb[0].mxu0
  %v666 = vadd.f32 0.0, %v665
  %667 = vdwg.mxu0
  %v669 = vrot.slane %v664, 4
  %v671 = vadd.f32 %v259, %v669
  %v672 = vxor.u32 %v671, 2147483648
  %v673 = vmul.f32 %v672, 1.442695
  %v674 = vpow.pop %v673
  %v675 = vadd.f32 %v674, 1.0
  %v676 = vrcp.pop %v675
  %v677 = vmul.f32 1.0, %v676
  %v679 = vrot.slane %v666, 4
  %v681 = vadd.f32 %v261, %v679
  %v682 = vxor.u32 %v681, 2147483648
  %v683 = vmul.f32 %v682, 1.442695
  %v684 = vpow.pop %v683
  %v685 = vadd.f32 %v684, 1.0
  %v686 = vrcp.pop %v685
  %v687 = vmul.f32 1.0, %v686
  %688 = vmatprep.subr.mxu0 0.0
  %689 = vmatpush1.msra.mxu0 %v376
  %690 = vmatprep.subr.mxu0 0.0
  %691 = vmatpush1.msra.mxu0 %v377
  %692 = vmatprep.subr.mxu0 0.0
  %693 = vmatpush1.msra.mxu0 %v378
  %694 = vmatprep.subr.mxu0 0.0
  %695 = vmatpush1.msra.mxu0 %v379
  %696 = vmatprep.subr.mxu0 0.0
  %697 = vmatpush1.msra.mxu0 %v380
  %698 = vmatprep.subr.mxu0 0.0
  %699 = vmatpush1.msra.mxu0 %v381
  %700 = vmatprep.subr.mxu0 0.0
  %701 = vmatpush1.msra.mxu0 %v382
  %702 = vmatprep.subr.mxu0 0.0
  %703 = vmatpush1.msra.mxu0 %v383
  %704 = vmatprep.subr.mxu0 0.0
  %705 = vmatpush1.msra.mxu0 %v384
  %706 = vmatprep.subr.mxu0 0.0
  %707 = vmatpush1.msra.mxu0 %v385
  %708 = vmatprep.subr.mxu0 0.0
  %709 = vmatpush1.msra.mxu0 %v386
  %710 = vmatprep.subr.mxu0 0.0
  %711 = vmatpush1.msra.mxu0 %v387
  %712 = vmatprep.subr.mxu0 0.0
  %713 = vmatpush1.msra.mxu0 %v388
  %714 = vmatprep.subr.mxu0 0.0
  %715 = vmatpush1.msra.mxu0 %v389
  %716 = vmatprep.subr.mxu0 0.0
  %717 = vmatpush1.msra.mxu0 %v390
  %718 = vmatprep.subr.mxu0 0.0
  %719 = vmatpush1.msra.mxu0 %v391
  %720 = vmatprep.subr.mxu0 0.0
  %721 = vmatpush1.msra.mxu0 0.0
  %722 = vmatprep.subr.mxu0 0.0
  %723 = vmatpush1.msra.mxu0 0.0
  %724 = vmatprep.subr.mxu0 0.0
  %725 = vmatpush1.msra.mxu0 0.0
  %726 = vmatprep.subr.mxu0 0.0
  %727 = vmatpush1.msra.mxu0 0.0
  %728 = vmatprep.subr.mxu0 0.0
  %729 = vmatpush1.msra.mxu0 0.0
  %730 = vmatprep.subr.mxu0 0.0
  %731 = vmatpush1.msra.mxu0 0.0
  %732 = vmatprep.subr.mxu0 0.0
  %733 = vmatpush1.msra.mxu0 0.0
  %734 = vmatprep.subr.mxu0 0.0
  %735 = vmatpush1.msra.mxu0 0.0
  %736 = vmatprep.subr.mxu0 0.0
  %737 = vmatpush1.msra.mxu0 0.0
  %738 = vmatprep.subr.mxu0 0.0
  %739 = vmatpush1.msra.mxu0 0.0
  %740 = vmatprep.subr.mxu0 0.0
  %741 = vmatpush1.msra.mxu0 0.0
  %742 = vmatprep.subr.mxu0 0.0
  %743 = vmatpush1.msra.mxu0 0.0
  %744 = vmatprep.subr.mxu0 0.0
  %745 = vmatpush1.msra.mxu0 0.0
  %746 = vmatprep.subr.mxu0 0.0
  %747 = vmatpush1.msra.mxu0 0.0
  %748 = vmatprep.subr.mxu0 0.0
  %749 = vmatpush1.msra.mxu0 0.0
  %750 = vmatprep.subr.mxu0 0.0
  %751 = vmatpush1.msra.mxu0 0.0
  %752 = vmatprep.mubr.f32.mxu0 0.0
  %753 = vmatmul.mubr.f32.gmra.mrb[0].mxu0 %v595
  %v754 = vpop.f32.mrb[0].mxu0
  %v755 = vadd.f32 %v409, %v754
  %v756 = vpop.f32.mrb[0].mxu0
  %757 = vdwg.mxu0
  %v759 = vrot.slane %v755, 4
  %v761 = vmul.f32 %v677, %v759
  %v762 = vadd.f32 %v336, %v761
  %v763 = vtanh.pop %v762
  %v765 = vrot.slane %v763, 2
  %v767 = vsub.f32 %v592, %v765
  %v769 = vrot.slane %v767, 6
  %v771 = vmul.f32 %v687, %v769
  %v772 = vadd.f32 %v763, %v771
  %773 = vst [vmem:[%s8] sm:$0x30] %v772
  %v775 = vrot.slane %v772, 4
  %777 = vmatprep.subr.mxu0 %v345
  %778 = vmatpush1.msra.mxu0 %v344
  %779 = vmatprep.subr.mxu0 %v347
  %780 = vmatpush1.msra.mxu0 %v346
  %781 = vmatprep.subr.mxu0 %v349
  %782 = vmatpush1.msra.mxu0 %v348
  %783 = vmatprep.subr.mxu0 %v351
  %784 = vmatpush1.msra.mxu0 %v350
  %785 = vmatprep.subr.mxu0 %v353
  %786 = vmatpush1.msra.mxu0 %v352
  %787 = vmatprep.subr.mxu0 %v355
  %788 = vmatpush1.msra.mxu0 %v354
  %789 = vmatprep.subr.mxu0 %v357
  %790 = vmatpush1.msra.mxu0 %v356
  %791 = vmatprep.subr.mxu0 %v359
  %792 = vmatpush1.msra.mxu0 %v358
  %793 = vmatprep.subr.mxu0 %v361
  %794 = vmatpush1.msra.mxu0 %v360
  %795 = vmatprep.subr.mxu0 %v363
  %796 = vmatpush1.msra.mxu0 %v362
  %797 = vmatprep.subr.mxu0 %v365
  %798 = vmatpush1.msra.mxu0 %v364
  %799 = vmatprep.subr.mxu0 %v367
  %800 = vmatpush1.msra.mxu0 %v366
  %801 = vmatprep.subr.mxu0 %v369
  %802 = vmatpush1.msra.mxu0 %v368
  %803 = vmatprep.subr.mxu0 %v371
  %804 = vmatpush1.msra.mxu0 %v370
  %805 = vmatprep.subr.mxu0 %v373
  %806 = vmatpush1.msra.mxu0 %v372
  %807 = vmatprep.subr.mxu0 %v375
  %808 = vmatpush1.msra.mxu0 %v374
  %809 = vmatprep.subr.mxu0 0.0
  %810 = vmatpush1.msra.mxu0 0.0
  %811 = vmatprep.subr.mxu0 0.0
  %812 = vmatpush1.msra.mxu0 0.0
  %813 = vmatprep.subr.mxu0 0.0
  %814 = vmatpush1.msra.mxu0 0.0
  %815 = vmatprep.subr.mxu0 0.0
  %816 = vmatpush1.msra.mxu0 0.0
  %817 = vmatprep.subr.mxu0 0.0
  %818 = vmatpush1.msra.mxu0 0.0
  %819 = vmatprep.subr.mxu0 0.0
  %820 = vmatpush1.msra.mxu0 0.0
  %821 = vmatprep.subr.mxu0 0.0
  %822 = vmatpush1.msra.mxu0 0.0
  %823 = vmatprep.subr.mxu0 0.0
  %824 = vmatpush1.msra.mxu0 0.0
  %825 = vmatprep.subr.mxu0 0.0
  %826 = vmatpush1.msra.mxu0 0.0
  %827 = vmatprep.subr.mxu0 0.0
  %828 = vmatpush1.msra.mxu0 0.0
  %829 = vmatprep.subr.mxu0 0.0
  %830 = vmatpush1.msra.mxu0 0.0
  %831 = vmatprep.subr.mxu0 0.0
  %832 = vmatpush1.msra.mxu0 0.0
  %833 = vmatprep.subr.mxu0 0.0
  %834 = vmatpush1.msra.mxu0 0.0
  %835 = vmatprep.subr.mxu0 0.0
  %836 = vmatpush1.msra.mxu0 0.0
  %837 = vmatprep.subr.mxu0 0.0
  %838 = vmatpush1.msra.mxu0 0.0
  %839 = vmatprep.subr.mxu0 0.0
  %840 = vmatpush1.msra.mxu0 0.0
  %841 = vmatprep.mubr.f32.mxu0 0.0
  %842 = vmatmul.mubr.f32.gmra.mrb[0].mxu0 %v775
  %v843 = vpop.f32.mrb[0].mxu0
  %v844 = vadd.f32 0.0, %v843
  %v845 = vpop.f32.mrb[0].mxu0
  %v846 = vadd.f32 0.0, %v845
  %847 = vdwg.mxu0
  %v849 = vrot.slane %v844, 2
  %v851 = vadd.f32 %v259, %v849
  %v852 = vxor.u32 %v851, 2147483648
  %v853 = vmul.f32 %v852, 1.442695
  %v854 = vpow.pop %v853
  %v855 = vadd.f32 %v854, 1.0
  %v856 = vrcp.pop %v855
  %v857 = vmul.f32 1.0, %v856
  %v859 = vrot.slane %v846, 2
  %v861 = vadd.f32 %v261, %v859
  %v862 = vxor.u32 %v861, 2147483648
  %v863 = vmul.f32 %v862, 1.442695
  %v864 = vpow.pop %v863
  %v865 = vadd.f32 %v864, 1.0
  %v866 = vrcp.pop %v865
  %v867 = vmul.f32 1.0, %v866
  %868 = vmatprep.subr.mxu0 0.0
  %869 = vmatpush1.msra.mxu0 %v376
  %870 = vmatprep.subr.mxu0 0.0
  %871 = vmatpush1.msra.mxu0 %v377
  %872 = vmatprep.subr.mxu0 0.0
  %873 = vmatpush1.msra.mxu0 %v378
  %874 = vmatprep.subr.mxu0 0.0
  %875 = vmatpush1.msra.mxu0 %v379
  %876 = vmatprep.subr.mxu0 0.0
  %877 = vmatpush1.msra.mxu0 %v380
  %878 = vmatprep.subr.mxu0 0.0
  %879 = vmatpush1.msra.mxu0 %v381
  %880 = vmatprep.subr.mxu0 0.0
  %881 = vmatpush1.msra.mxu0 %v382
  %882 = vmatprep.subr.mxu0 0.0
  %883 = vmatpush1.msra.mxu0 %v383
  %884 = vmatprep.subr.mxu0 0.0
  %885 = vmatpush1.msra.mxu0 %v384
  %886 = vmatprep.subr.mxu0 0.0
  %887 = vmatpush1.msra.mxu0 %v385
  %888 = vmatprep.subr.mxu0 0.0
  %889 = vmatpush1.msra.mxu0 %v386
  %890 = vmatprep.subr.mxu0 0.0
  %891 = vmatpush1.msra.mxu0 %v387
  %892 = vmatprep.subr.mxu0 0.0
  %893 = vmatpush1.msra.mxu0 %v388
  %894 = vmatprep.subr.mxu0 0.0
  %895 = vmatpush1.msra.mxu0 %v389
  %896 = vmatprep.subr.mxu0 0.0
  %897 = vmatpush1.msra.mxu0 %v390
  %898 = vmatprep.subr.mxu0 0.0
  %899 = vmatpush1.msra.mxu0 %v391
  %900 = vmatprep.subr.mxu0 0.0
  %901 = vmatpush1.msra.mxu0 0.0
  %902 = vmatprep.subr.mxu0 0.0
  %903 = vmatpush1.msra.mxu0 0.0
  %904 = vmatprep.subr.mxu0 0.0
  %905 = vmatpush1.msra.mxu0 0.0
  %906 = vmatprep.subr.mxu0 0.0
  %907 = vmatpush1.msra.mxu0 0.0
  %908 = vmatprep.subr.mxu0 0.0
  %909 = vmatpush1.msra.mxu0 0.0
  %910 = vmatprep.subr.mxu0 0.0
  %911 = vmatpush1.msra.mxu0 0.0
  %912 = vmatprep.subr.mxu0 0.0
  %913 = vmatpush1.msra.mxu0 0.0
  %914 = vmatprep.subr.mxu0 0.0
  %915 = vmatpush1.msra.mxu0 0.0
  %916 = vmatprep.subr.mxu0 0.0
  %917 = vmatpush1.msra.mxu0 0.0
  %918 = vmatprep.subr.mxu0 0.0
  %919 = vmatpush1.msra.mxu0 0.0
  %920 = vmatprep.subr.mxu0 0.0
  %921 = vmatpush1.msra.mxu0 0.0
  %922 = vmatprep.subr.mxu0 0.0
  %923 = vmatpush1.msra.mxu0 0.0
  %924 = vmatprep.subr.mxu0 0.0
  %925 = vmatpush1.msra.mxu0 0.0
  %926 = vmatprep.subr.mxu0 0.0
  %927 = vmatpush1.msra.mxu0 0.0
  %928 = vmatprep.subr.mxu0 0.0
  %929 = vmatpush1.msra.mxu0 0.0
  %930 = vmatprep.subr.mxu0 0.0
  %931 = vmatpush1.msra.mxu0 0.0
  %932 = vmatprep.mubr.f32.mxu0 0.0
  %933 = vmatmul.mubr.f32.gmra.mrb[0].mxu0 %v775
  %v934 = vpop.f32.mrb[0].mxu0
  %v935 = vadd.f32 %v409, %v934
  %v936 = vpop.f32.mrb[0].mxu0
  %937 = vdwg.mxu0
  %v939 = vrot.slane %v935, 2
  %v941 = vmul.f32 %v857, %v939
  %v942 = vadd.f32 %v336, %v941
  %v943 = vtanh.pop %v942
  %v945 = vrot.slane %v943, 2
  %v947 = vsub.f32 %v772, %v945
  %v949 = vrot.slane %v947, 6
  %v951 = vmul.f32 %v867, %v949
  %v952 = vadd.f32 %v943, %v951
  %953 = vst [vmem:[%s8] sm:$0xc0] %v952
  %v955 = vrot.slane %v952, 6
  %957 = vmatprep.subr.mxu0 %v345
  %958 = vmatpush1.msra.mxu0 %v344
  %959 = vmatprep.subr.mxu0 %v347
  %960 = vmatpush1.msra.mxu0 %v346
  %961 = vmatprep.subr.mxu0 %v349
  %962 = vmatpush1.msra.mxu0 %v348
  %963 = vmatprep.subr.mxu0 %v351
  %964 = vmatpush1.msra.mxu0 %v350
  %965 = vmatprep.subr.mxu0 %v353
  %966 = vmatpush1.msra.mxu0 %v352
  %967 = vmatprep.subr.mxu0 %v355
  %968 = vmatpush1.msra.mxu0 %v354
  %969 = vmatprep.subr.mxu0 %v357
  %970 = vmatpush1.msra.mxu0 %v356
  %971 = vmatprep.subr.mxu0 %v359
  %972 = vmatpush1.msra.mxu0 %v358
  %973 = vmatprep.subr.mxu0 %v361
  %974 = vmatpush1.msra.mxu0 %v360
  %975 = vmatprep.subr.mxu0 %v363
  %976 = vmatpush1.msra.mxu0 %v362
  %977 = vmatprep.subr.mxu0 %v365
  %978 = vmatpush1.msra.mxu0 %v364
  %979 = vmatprep.subr.mxu0 %v367
  %980 = vmatpush1.msra.mxu0 %v366
  %981 = vmatprep.subr.mxu0 %v369
  %982 = vmatpush1.msra.mxu0 %v368
  %983 = vmatprep.subr.mxu0 %v371
  %984 = vmatpush1.msra.mxu0 %v370
  %985 = vmatprep.subr.mxu0 %v373
  %986 = vmatpush1.msra.mxu0 %v372
  %987 = vmatprep.subr.mxu0 %v375
  %988 = vmatpush1.msra.mxu0 %v374
  %989 = vmatprep.subr.mxu0 0.0
  %990 = vmatpush1.msra.mxu0 0.0
  %991 = vmatprep.subr.mxu0 0.0
  %992 = vmatpush1.msra.mxu0 0.0
  %993 = vmatprep.subr.mxu0 0.0
  %994 = vmatpush1.msra.mxu0 0.0
  %995 = vmatprep.subr.mxu0 0.0
  %996 = vmatpush1.msra.mxu0 0.0
  %997 = vmatprep.subr.mxu0 0.0
  %998 = vmatpush1.msra.mxu0 0.0
  %999 = vmatprep.subr.mxu0 0.0
  %1000 = vmatpush1.msra.mxu0 0.0
  %1001 = vmatprep.subr.mxu0 0.0
  %1002 = vmatpush1.msra.mxu0 0.0
  %1003 = vmatprep.subr.mxu0 0.0
  %1004 = vmatpush1.msra.mxu0 0.0
  %1005 = vmatprep.subr.mxu0 0.0
  %1006 = vmatpush1.msra.mxu0 0.0
  %1007 = vmatprep.subr.mxu0 0.0
  %1008 = vmatpush1.msra.mxu0 0.0
  %1009 = vmatprep.subr.mxu0 0.0
  %1010 = vmatpush1.msra.mxu0 0.0
  %1011 = vmatprep.subr.mxu0 0.0
  %1012 = vmatpush1.msra.mxu0 0.0
  %1013 = vmatprep.subr.mxu0 0.0
  %1014 = vmatpush1.msra.mxu0 0.0
  %1015 = vmatprep.subr.mxu0 0.0
  %1016 = vmatpush1.msra.mxu0 0.0
  %1017 = vmatprep.subr.mxu0 0.0
  %1018 = vmatpush1.msra.mxu0 0.0
  %1019 = vmatprep.subr.mxu0 0.0
  %1020 = vmatpush1.msra.mxu0 0.0
  %1021 = vmatprep.mubr.f32.mxu0 0.0
  %1022 = vmatmul.mubr.f32.gmra.mrb[0].mxu0 %v955
  %v1023 = vpop.f32.mrb[0].mxu0
  %v1024 = vadd.f32 0.0, %v1023
  %v1025 = vpop.f32.mrb[0].mxu0
  %v1026 = vadd.f32 0.0, %v1025
  %1027 = vdwg.mxu0
  %v1028 = vadd.f32 %v265, %v1024
  %v1029 = vxor.u32 %v1028, 2147483648
  %v1030 = vmul.f32 %v1029, 1.442695
  %v1031 = vpow.pop %v1030
  %v1032 = vadd.f32 %v1031, 1.0
  %v1033 = vrcp.pop %v1032
  %v1034 = vmul.f32 1.0, %v1033
  %v1035 = vadd.f32 %v267, %v1026
  %v1036 = vxor.u32 %v1035, 2147483648
  %v1037 = vmul.f32 %v1036, 1.442695
  %v1038 = vpow.pop %v1037
  %v1039 = vadd.f32 %v1038, 1.0
  %v1040 = vrcp.pop %v1039
  %v1041 = vmul.f32 1.0, %v1040
  %1042 = vmatprep.subr.mxu0 0.0
  %1043 = vmatpush1.msra.mxu0 %v376
  %1044 = vmatprep.subr.mxu0 0.0
  %1045 = vmatpush1.msra.mxu0 %v377
  %1046 = vmatprep.subr.mxu0 0.0
  %1047 = vmatpush1.msra.mxu0 %v378
  %1048 = vmatprep.subr.mxu0 0.0
  %1049 = vmatpush1.msra.mxu0 %v379
  %1050 = vmatprep.subr.mxu0 0.0
  %1051 = vmatpush1.msra.mxu0 %v380
  %1052 = vmatprep.subr.mxu0 0.0
  %1053 = vmatpush1.msra.mxu0 %v381
  %1054 = vmatprep.subr.mxu0 0.0
  %1055 = vmatpush1.msra.mxu0 %v382
  %1056 = vmatprep.subr.mxu0 0.0
  %1057 = vmatpush1.msra.mxu0 %v383
  %1058 = vmatprep.subr.mxu0 0.0
  %1059 = vmatpush1.msra.mxu0 %v384
  %1060 = vmatprep.subr.mxu0 0.0
  %1061 = vmatpush1.msra.mxu0 %v385
  %1062 = vmatprep.subr.mxu0 0.0
  %1063 = vmatpush1.msra.mxu0 %v386
  %1064 = vmatprep.subr.mxu0 0.0
  %1065 = vmatpush1.msra.mxu0 %v387
  %1066 = vmatprep.subr.mxu0 0.0
  %1067 = vmatpush1.msra.mxu0 %v388
  %1068 = vmatprep.subr.mxu0 0.0
  %1069 = vmatpush1.msra.mxu0 %v389
  %1070 = vmatprep.subr.mxu0 0.0
  %1071 = vmatpush1.msra.mxu0 %v390
  %1072 = vmatprep.subr.mxu0 0.0
  %1073 = vmatpush1.msra.mxu0 %v391
  %1074 = vmatprep.subr.mxu0 0.0
  %1075 = vmatpush1.msra.mxu0 0.0
  %1076 = vmatprep.subr.mxu0 0.0
  %1077 = vmatpush1.msra.mxu0 0.0
  %1078 = vmatprep.subr.mxu0 0.0
  %1079 = vmatpush1.msra.mxu0 0.0
  %1080 = vmatprep.subr.mxu0 0.0
  %1081 = vmatpush1.msra.mxu0 0.0
  %1082 = vmatprep.subr.mxu0 0.0
  %1083 = vmatpush1.msra.mxu0 0.0
  %1084 = vmatprep.subr.mxu0 0.0
  %1085 = vmatpush1.msra.mxu0 0.0
  %1086 = vmatprep.subr.mxu0 0.0
  %1087 = vmatpush1.msra.mxu0 0.0
  %1088 = vmatprep.subr.mxu0 0.0
  %1089 = vmatpush1.msra.mxu0 0.0
  %1090 = vmatprep.subr.mxu0 0.0
  %1091 = vmatpush1.msra.mxu0 0.0
  %1092 = vmatprep.subr.mxu0 0.0
  %1093 = vmatpush1.msra.mxu0 0.0
  %1094 = vmatprep.subr.mxu0 0.0
  %1095 = vmatpush1.msra.mxu0 0.0
  %1096 = vmatprep.subr.mxu0 0.0
  %1097 = vmatpush1.msra.mxu0 0.0
  %1098 = vmatprep.subr.mxu0 0.0
  %1099 = vmatpush1.msra.mxu0 0.0
  %1100 = vmatprep.subr.mxu0 0.0
  %1101 = vmatpush1.msra.mxu0 0.0
  %1102 = vmatprep.subr.mxu0 0.0
  %1103 = vmatpush1.msra.mxu0 0.0
  %1104 = vmatprep.subr.mxu0 0.0
  %1105 = vmatpush1.msra.mxu0 0.0
  %1106 = vmatprep.mubr.f32.mxu0 0.0
  %1107 = vmatmul.mubr.f32.gmra.mrb[0].mxu0 %v955
  %v1108 = vpop.f32.mrb[0].mxu0
  %v1109 = vadd.f32 %v409, %v1108
  %v1110 = vpop.f32.mrb[0].mxu0
  %1111 = vdwg.mxu0
  %v1112 = vmul.f32 %v1034, %v1109
  %v1113 = vadd.f32 %v341, %v1112
  %v1114 = vtanh.pop %v1113
  %v1116 = vrot.slane %v1114, 2
  %v1118 = vsub.f32 %v952, %v1116
  %v1120 = vrot.slane %v1118, 6
  %v1122 = vmul.f32 %v1041, %v1120
  %v1123 = vadd.f32 %v1114, %v1122
  %1124 = vst [vmem:[%s8 + $0x8] sm:$0x3] %v1123
  %1125 = vmatprep.subr.mxu0 %v345
  %1126 = vmatpush1.msra.mxu0 %v344
  %1127 = vmatprep.subr.mxu0 %v347
  %1128 = vmatpush1.msra.mxu0 %v346
  %1129 = vmatprep.subr.mxu0 %v349
  %1130 = vmatpush1.msra.mxu0 %v348
  %1131 = vmatprep.subr.mxu0 %v351
  %1132 = vmatpush1.msra.mxu0 %v350
  %1133 = vmatprep.subr.mxu0 %v353
  %1134 = vmatpush1.msra.mxu0 %v352
  %1135 = vmatprep.subr.mxu0 %v355
  %1136 = vmatpush1.msra.mxu0 %v354
  %1137 = vmatprep.subr.mxu0 %v357
  %1138 = vmatpush1.msra.mxu0 %v356
  %1139 = vmatprep.subr.mxu0 %v359
  %1140 = vmatpush1.msra.mxu0 %v358
  %1141 = vmatprep.subr.mxu0 %v361
  %1142 = vmatpush1.msra.mxu0 %v360
  %1143 = vmatprep.subr.mxu0 %v363
  %1144 = vmatpush1.msra.mxu0 %v362
  %1145 = vmatprep.subr.mxu0 %v365
  %1146 = vmatpush1.msra.mxu0 %v364
  %1147 = vmatprep.subr.mxu0 %v367
  %1148 = vmatpush1.msra.mxu0 %v366
  %1149 = vmatprep.subr.mxu0 %v369
  %1150 = vmatpush1.msra.mxu0 %v368
  %1151 = vmatprep.subr.mxu0 %v371
  %1152 = vmatpush1.msra.mxu0 %v370
  %1153 = vmatprep.subr.mxu0 %v373
  %1154 = vmatpush1.msra.mxu0 %v372
  %1155 = vmatprep.subr.mxu0 %v375
  %1156 = vmatpush1.msra.mxu0 %v374
  %1157 = vmatprep.subr.mxu0 0.0
  %1158 = vmatpush1.msra.mxu0 0.0
  %1159 = vmatprep.subr.mxu0 0.0
  %1160 = vmatpush1.msra.mxu0 0.0
  %1161 = vmatprep.subr.mxu0 0.0
  %1162 = vmatpush1.msra.mxu0 0.0
  %1163 = vmatprep.subr.mxu0 0.0
  %1164 = vmatpush1.msra.mxu0 0.0
  %1165 = vmatprep.subr.mxu0 0.0
  %1166 = vmatpush1.msra.mxu0 0.0
  %1167 = vmatprep.subr.mxu0 0.0
  %1168 = vmatpush1.msra.mxu0 0.0
  %1169 = vmatprep.subr.mxu0 0.0
  %1170 = vmatpush1.msra.mxu0 0.0
  %1171 = vmatprep.subr.mxu0 0.0
  %1172 = vmatpush1.msra.mxu0 0.0
  %1173 = vmatprep.subr.mxu0 0.0
  %1174 = vmatpush1.msra.mxu0 0.0
  %1175 = vmatprep.subr.mxu0 0.0
  %1176 = vmatpush1.msra.mxu0 0.0
  %1177 = vmatprep.subr.mxu0 0.0
  %1178 = vmatpush1.msra.mxu0 0.0
  %1179 = vmatprep.subr.mxu0 0.0
  %1180 = vmatpush1.msra.mxu0 0.0
  %1181 = vmatprep.subr.mxu0 0.0
  %1182 = vmatpush1.msra.mxu0 0.0
  %1183 = vmatprep.subr.mxu0 0.0
  %1184 = vmatpush1.msra.mxu0 0.0
  %1185 = vmatprep.subr.mxu0 0.0
  %1186 = vmatpush1.msra.mxu0 0.0
  %1187 = vmatprep.subr.mxu0 0.0
  %1188 = vmatpush1.msra.mxu0 0.0
  %1189 = vmatprep.mubr.f32.mxu0 0.0
  %1190 = vmatmul.mubr.f32.gmra.mrb[0].mxu0 %v1123
  %v1191 = vpop.f32.mrb[0].mxu0
  %v1192 = vadd.f32 0.0, %v1191
  %v1193 = vpop.f32.mrb[0].mxu0
  %v1194 = vadd.f32 0.0, %v1193
  %1195 = vdwg.mxu0
  %v1197 = vrot.slane %v1192, 6
  %v1199 = vadd.f32 %v265, %v1197
  %v1200 = vxor.u32 %v1199, 2147483648
  %v1201 = vmul.f32 %v1200, 1.442695
  %v1202 = vpow.pop %v1201
  %v1203 = vadd.f32 %v1202, 1.0
  %v1204 = vrcp.pop %v1203
  %v1205 = vmul.f32 1.0, %v1204
  %v1207 = vrot.slane %v1194, 6
  %v1209 = vadd.f32 %v267, %v1207
  %v1210 = vxor.u32 %v1209, 2147483648
  %v1211 = vmul.f32 %v1210, 1.442695
  %v1212 = vpow.pop %v1211
  %v1213 = vadd.f32 %v1212, 1.0
  %v1214 = vrcp.pop %v1213
  %v1215 = vmul.f32 1.0, %v1214
  %1216 = vmatprep.subr.mxu0 0.0
  %1217 = vmatpush1.msra.mxu0 %v376
  %1218 = vmatprep.subr.mxu0 0.0
  %1219 = vmatpush1.msra.mxu0 %v377
  %1220 = vmatprep.subr.mxu0 0.0
  %1221 = vmatpush1.msra.mxu0 %v378
  %1222 = vmatprep.subr.mxu0 0.0
  %1223 = vmatpush1.msra.mxu0 %v379
  %1224 = vmatprep.subr.mxu0 0.0
  %1225 = vmatpush1.msra.mxu0 %v380
  %1226 = vmatprep.subr.mxu0 0.0
  %1227 = vmatpush1.msra.mxu0 %v381
  %1228 = vmatprep.subr.mxu0 0.0
  %1229 = vmatpush1.msra.mxu0 %v382
  %1230 = vmatprep.subr.mxu0 0.0
  %1231 = vmatpush1.msra.mxu0 %v383
  %1232 = vmatprep.subr.mxu0 0.0
  %1233 = vmatpush1.msra.mxu0 %v384
  %1234 = vmatprep.subr.mxu0 0.0
  %1235 = vmatpush1.msra.mxu0 %v385
  %1236 = vmatprep.subr.mxu0 0.0
  %1237 = vmatpush1.msra.mxu0 %v386
  %1238 = vmatprep.subr.mxu0 0.0
  %1239 = vmatpush1.msra.mxu0 %v387
  %1240 = vmatprep.subr.mxu0 0.0
  %1241 = vmatpush1.msra.mxu0 %v388
  %1242 = vmatprep.subr.mxu0 0.0
  %1243 = vmatpush1.msra.mxu0 %v389
  %1244 = vmatprep.subr.mxu0 0.0
  %1245 = vmatpush1.msra.mxu0 %v390
  %1246 = vmatprep.subr.mxu0 0.0
  %1247 = vmatpush1.msra.mxu0 %v391
  %1248 = vmatprep.subr.mxu0 0.0
  %1249 = vmatpush1.msra.mxu0 0.0
  %1250 = vmatprep.subr.mxu0 0.0
  %1251 = vmatpush1.msra.mxu0 0.0
  %1252 = vmatprep.subr.mxu0 0.0
  %1253 = vmatpush1.msra.mxu0 0.0
  %1254 = vmatprep.subr.mxu0 0.0
  %1255 = vmatpush1.msra.mxu0 0.0
  %1256 = vmatprep.subr.mxu0 0.0
  %1257 = vmatpush1.msra.mxu0 0.0
  %1258 = vmatprep.subr.mxu0 0.0
  %1259 = vmatpush1.msra.mxu0 0.0
  %1260 = vmatprep.subr.mxu0 0.0
  %1261 = vmatpush1.msra.mxu0 0.0
  %1262 = vmatprep.subr.mxu0 0.0
  %1263 = vmatpush1.msra.mxu0 0.0
  %1264 = vmatprep.subr.mxu0 0.0
  %1265 = vmatpush1.msra.mxu0 0.0
  %1266 = vmatprep.subr.mxu0 0.0
  %1267 = vmatpush1.msra.mxu0 0.0
  %1268 = vmatprep.subr.mxu0 0.0
  %1269 = vmatpush1.msra.mxu0 0.0
  %1270 = vmatprep.subr.mxu0 0.0
  %1271 = vmatpush1.msra.mxu0 0.0
  %1272 = vmatprep.subr.mxu0 0.0
  %1273 = vmatpush1.msra.mxu0 0.0
  %1274 = vmatprep.subr.mxu0 0.0
  %1275 = vmatpush1.msra.mxu0 0.0
  %1276 = vmatprep.subr.mxu0 0.0
  %1277 = vmatpush1.msra.mxu0 0.0
  %1278 = vmatprep.subr.mxu0 0.0
  %1279 = vmatpush1.msra.mxu0 0.0
  %1280 = vmatprep.mubr.f32.mxu0 0.0
  %1281 = vmatmul.mubr.f32.gmra.mrb[0].mxu0 %v1123
  %v1282 = vpop.f32.mrb[0].mxu0
  %v1283 = vadd.f32 %v409, %v1282
  %v1284 = vpop.f32.mrb[0].mxu0
  %1285 = vdwg.mxu0
  %v1287 = vrot.slane %v1283, 6
  %v1289 = vmul.f32 %v1205, %v1287
  %v1290 = vadd.f32 %v341, %v1289
  %v1291 = vtanh.pop %v1290
  %v1293 = vrot.slane %v1291, 2
  %v1295 = vsub.f32 %v1123, %v1293
  %v1297 = vrot.slane %v1295, 6
  %v1299 = vmul.f32 %v1215, %v1297
  %v1300 = vadd.f32 %v1291, %v1299
  %1301 = vst [vmem:[%s8 + $0x8] sm:$0xc] %v1300
  %v1303 = vrot.slane %v1300, 2
  %1305 = vmatprep.subr.mxu0 %v345
  %1306 = vmatpush1.msra.mxu0 %v344
  %1307 = vmatprep.subr.mxu0 %v347
  %1308 = vmatpush1.msra.mxu0 %v346
  %1309 = vmatprep.subr.mxu0 %v349
  %1310 = vmatpush1.msra.mxu0 %v348
  %1311 = vmatprep.subr.mxu0 %v351
  %1312 = vmatpush1.msra.mxu0 %v350
  %1313 = vmatprep.subr.mxu0 %v353
  %1314 = vmatpush1.msra.mxu0 %v352
  %1315 = vmatprep.subr.mxu0 %v355
  %1316 = vmatpush1.msra.mxu0 %v354
  %1317 = vmatprep.subr.mxu0 %v357
  %1318 = vmatpush1.msra.mxu0 %v356
  %1319 = vmatprep.subr.mxu0 %v359
  %1320 = vmatpush1.msra.mxu0 %v358
  %1321 = vmatprep.subr.mxu0 %v361
  %1322 = vmatpush1.msra.mxu0 %v360
  %1323 = vmatprep.subr.mxu0 %v363
  %1324 = vmatpush1.msra.mxu0 %v362
  %1325 = vmatprep.subr.mxu0 %v365
  %1326 = vmatpush1.msra.mxu0 %v364
  %1327 = vmatprep.subr.mxu0 %v367
  %1328 = vmatpush1.msra.mxu0 %v366
  %1329 = vmatprep.subr.mxu0 %v369
  %1330 = vmatpush1.msra.mxu0 %v368
  %1331 = vmatprep.subr.mxu0 %v371
  %1332 = vmatpush1.msra.mxu0 %v370
  %1333 = vmatprep.subr.mxu0 %v373
  %1334 = vmatpush1.msra.mxu0 %v372
  %1335 = vmatprep.subr.mxu0 %v375
  %1336 = vmatpush1.msra.mxu0 %v374
  %1337 = vmatprep.subr.mxu0 0.0
  %1338 = vmatpush1.msra.mxu0 0.0
  %1339 = vmatprep.subr.mxu0 0.0
  %1340 = vmatpush1.msra.mxu0 0.0
  %1341 = vmatprep.subr.mxu0 0.0
  %1342 = vmatpush1.msra.mxu0 0.0
  %1343 = vmatprep.subr.mxu0 0.0
  %1344 = vmatpush1.msra.mxu0 0.0
  %1345 = vmatprep.subr.mxu0 0.0
  %1346 = vmatpush1.msra.mxu0 0.0
  %1347 = vmatprep.subr.mxu0 0.0
  %1348 = vmatpush1.msra.mxu0 0.0
  %1349 = vmatprep.subr.mxu0 0.0
  %1350 = vmatpush1.msra.mxu0 0.0
  %1351 = vmatprep.subr.mxu0 0.0
  %1352 = vmatpush1.msra.mxu0 0.0
  %1353 = vmatprep.subr.mxu0 0.0
  %1354 = vmatpush1.msra.mxu0 0.0
  %1355 = vmatprep.subr.mxu0 0.0
  %1356 = vmatpush1.msra.mxu0 0.0
  %1357 = vmatprep.subr.mxu0 0.0
  %1358 = vmatpush1.msra.mxu0 0.0
  %1359 = vmatprep.subr.mxu0 0.0
  %1360 = vmatpush1.msra.mxu0 0.0
  %1361 = vmatprep.subr.mxu0 0.0
  %1362 = vmatpush1.msra.mxu0 0.0
  %1363 = vmatprep.subr.mxu0 0.0
  %1364 = vmatpush1.msra.mxu0 0.0
  %1365 = vmatprep.subr.mxu0 0.0
  %1366 = vmatpush1.msra.mxu0 0.0
  %1367 = vmatprep.subr.mxu0 0.0
  %1368 = vmatpush1.msra.mxu0 0.0
  %1369 = vmatprep.mubr.f32.mxu0 0.0
  %1370 = vmatmul.mubr.f32.gmra.mrb[0].mxu0 %v1303
  %v1371 = vpop.f32.mrb[0].mxu0
  %v1372 = vadd.f32 0.0, %v1371
  %v1373 = vpop.f32.mrb[0].mxu0
  %v1374 = vadd.f32 0.0, %v1373
  %1375 = vdwg.mxu0
  %v1377 = vrot.slane %v1372, 4
  %v1379 = vadd.f32 %v265, %v1377
  %v1380 = vxor.u32 %v1379, 2147483648
  %v1381 = vmul.f32 %v1380, 1.442695
  %v1382 = vpow.pop %v1381
  %v1383 = vadd.f32 %v1382, 1.0
  %v1384 = vrcp.pop %v1383
  %v1385 = vmul.f32 1.0, %v1384
  %v1387 = vrot.slane %v1374, 4
  %v1389 = vadd.f32 %v267, %v1387
  %v1390 = vxor.u32 %v1389, 2147483648
  %v1391 = vmul.f32 %v1390, 1.442695
  %v1392 = vpow.pop %v1391
  %v1393 = vadd.f32 %v1392, 1.0
  %v1394 = vrcp.pop %v1393
  %v1395 = vmul.f32 1.0, %v1394
  %1396 = vmatprep.subr.mxu0 0.0
  %1397 = vmatpush1.msra.mxu0 %v376
  %1398 = vmatprep.subr.mxu0 0.0
  %1399 = vmatpush1.msra.mxu0 %v377
  %1400 = vmatprep.subr.mxu0 0.0
  %1401 = vmatpush1.msra.mxu0 %v378
  %1402 = vmatprep.subr.mxu0 0.0
  %1403 = vmatpush1.msra.mxu0 %v379
  %1404 = vmatprep.subr.mxu0 0.0
  %1405 = vmatpush1.msra.mxu0 %v380
  %1406 = vmatprep.subr.mxu0 0.0
  %1407 = vmatpush1.msra.mxu0 %v381
  %1408 = vmatprep.subr.mxu0 0.0
  %1409 = vmatpush1.msra.mxu0 %v382
  %1410 = vmatprep.subr.mxu0 0.0
  %1411 = vmatpush1.msra.mxu0 %v383
  %1412 = vmatprep.subr.mxu0 0.0
  %1413 = vmatpush1.msra.mxu0 %v384
  %1414 = vmatprep.subr.mxu0 0.0
  %1415 = vmatpush1.msra.mxu0 %v385
  %1416 = vmatprep.subr.mxu0 0.0
  %1417 = vmatpush1.msra.mxu0 %v386
  %1418 = vmatprep.subr.mxu0 0.0
  %1419 = vmatpush1.msra.mxu0 %v387
  %1420 = vmatprep.subr.mxu0 0.0
  %1421 = vmatpush1.msra.mxu0 %v388
  %1422 = vmatprep.subr.mxu0 0.0
  %1423 = vmatpush1.msra.mxu0 %v389
  %1424 = vmatprep.subr.mxu0 0.0
  %1425 = vmatpush1.msra.mxu0 %v390
  %1426 = vmatprep.subr.mxu0 0.0
  %1427 = vmatpush1.msra.mxu0 %v391
  %1428 = vmatprep.subr.mxu0 0.0
  %1429 = vmatpush1.msra.mxu0 0.0
  %1430 = vmatprep.subr.mxu0 0.0
  %1431 = vmatpush1.msra.mxu0 0.0
  %1432 = vmatprep.subr.mxu0 0.0
  %1433 = vmatpush1.msra.mxu0 0.0
  %1434 = vmatprep.subr.mxu0 0.0
  %1435 = vmatpush1.msra.mxu0 0.0
  %1436 = vmatprep.subr.mxu0 0.0
  %1437 = vmatpush1.msra.mxu0 0.0
  %1438 = vmatprep.subr.mxu0 0.0
  %1439 = vmatpush1.msra.mxu0 0.0
  %1440 = vmatprep.subr.mxu0 0.0
  %1441 = vmatpush1.msra.mxu0 0.0
  %1442 = vmatprep.subr.mxu0 0.0
  %1443 = vmatpush1.msra.mxu0 0.0
  %1444 = vmatprep.subr.mxu0 0.0
  %1445 = vmatpush1.msra.mxu0 0.0
  %1446 = vmatprep.subr.mxu0 0.0
  %1447 = vmatpush1.msra.mxu0 0.0
  %1448 = vmatprep.subr.mxu0 0.0
  %1449 = vmatpush1.msra.mxu0 0.0
  %1450 = vmatprep.subr.mxu0 0.0
  %1451 = vmatpush1.msra.mxu0 0.0
  %1452 = vmatprep.subr.mxu0 0.0
  %1453 = vmatpush1.msra.mxu0 0.0
  %1454 = vmatprep.subr.mxu0 0.0
  %1455 = vmatpush1.msra.mxu0 0.0
  %1456 = vmatprep.subr.mxu0 0.0
  %1457 = vmatpush1.msra.mxu0 0.0
  %1458 = vmatprep.subr.mxu0 0.0
  %1459 = vmatpush1.msra.mxu0 0.0
  %1460 = vmatprep.mubr.f32.mxu0 0.0
  %1461 = vmatmul.mubr.f32.gmra.mrb[0].mxu0 %v1303
  %v1462 = vpop.f32.mrb[0].mxu0
  %v1463 = vadd.f32 %v409, %v1462
  %v1464 = vpop.f32.mrb[0].mxu0
  %1465 = vdwg.mxu0
  %v1467 = vrot.slane %v1463, 4
  %v1469 = vmul.f32 %v1385, %v1467
  %v1470 = vadd.f32 %v341, %v1469
  %v1471 = vtanh.pop %v1470
  %v1473 = vrot.slane %v1471, 2
  %v1475 = vsub.f32 %v1300, %v1473
  %v1477 = vrot.slane %v1475, 6
  %v1479 = vmul.f32 %v1395, %v1477
  %v1480 = vadd.f32 %v1471, %v1479
  %1481 = vst [vmem:[%s8 + $0x8] sm:$0x30] %v1480
  %v1483 = vrot.slane %v1480, 4
  %1485 = vmatprep.subr.mxu0 %v345
  %1486 = vmatpush1.msra.mxu0 %v344
  %1487 = vmatprep.subr.mxu0 %v347
  %1488 = vmatpush1.msra.mxu0 %v346
  %1489 = vmatprep.subr.mxu0 %v349
  %1490 = vmatpush1.msra.mxu0 %v348
  %1491 = vmatprep.subr.mxu0 %v351
  %1492 = vmatpush1.msra.mxu0 %v350
  %1493 = vmatprep.subr.mxu0 %v353
  %1494 = vmatpush1.msra.mxu0 %v352
  %1495 = vmatprep.subr.mxu0 %v355
  %1496 = vmatpush1.msra.mxu0 %v354
  %1497 = vmatprep.subr.mxu0 %v357
  %1498 = vmatpush1.msra.mxu0 %v356
  %1499 = vmatprep.subr.mxu0 %v359
  %1500 = vmatpush1.msra.mxu0 %v358
  %1501 = vmatprep.subr.mxu0 %v361
  %1502 = vmatpush1.msra.mxu0 %v360
  %1503 = vmatprep.subr.mxu0 %v363
  %1504 = vmatpush1.msra.mxu0 %v362
  %1505 = vmatprep.subr.mxu0 %v365
  %1506 = vmatpush1.msra.mxu0 %v364
  %1507 = vmatprep.subr.mxu0 %v367
  %1508 = vmatpush1.msra.mxu0 %v366
  %1509 = vmatprep.subr.mxu0 %v369
  %1510 = vmatpush1.msra.mxu0 %v368
  %1511 = vmatprep.subr.mxu0 %v371
  %1512 = vmatpush1.msra.mxu0 %v370
  %1513 = vmatprep.subr.mxu0 %v373
  %1514 = vmatpush1.msra.mxu0 %v372
  %1515 = vmatprep.subr.mxu0 %v375
  %1516 = vmatpush1.msra.mxu0 %v374
  %1517 = vmatprep.subr.mxu0 0.0
  %1518 = vmatpush1.msra.mxu0 0.0
  %1519 = vmatprep.subr.mxu0 0.0
  %1520 = vmatpush1.msra.mxu0 0.0
  %1521 = vmatprep.subr.mxu0 0.0
  %1522 = vmatpush1.msra.mxu0 0.0
  %1523 = vmatprep.subr.mxu0 0.0
  %1524 = vmatpush1.msra.mxu0 0.0
  %1525 = vmatprep.subr.mxu0 0.0
  %1526 = vmatpush1.msra.mxu0 0.0
  %1527 = vmatprep.subr.mxu0 0.0
  %1528 = vmatpush1.msra.mxu0 0.0
  %1529 = vmatprep.subr.mxu0 0.0
  %1530 = vmatpush1.msra.mxu0 0.0
  %1531 = vmatprep.subr.mxu0 0.0
  %1532 = vmatpush1.msra.mxu0 0.0
  %1533 = vmatprep.subr.mxu0 0.0
  %1534 = vmatpush1.msra.mxu0 0.0
  %1535 = vmatprep.subr.mxu0 0.0
  %1536 = vmatpush1.msra.mxu0 0.0
  %1537 = vmatprep.subr.mxu0 0.0
  %1538 = vmatpush1.msra.mxu0 0.0
  %1539 = vmatprep.subr.mxu0 0.0
  %1540 = vmatpush1.msra.mxu0 0.0
  %1541 = vmatprep.subr.mxu0 0.0
  %1542 = vmatpush1.msra.mxu0 0.0
  %1543 = vmatprep.subr.mxu0 0.0
  %1544 = vmatpush1.msra.mxu0 0.0
  %1545 = vmatprep.subr.mxu0 0.0
  %1546 = vmatpush1.msra.mxu0 0.0
  %1547 = vmatprep.subr.mxu0 0.0
  %1548 = vmatpush1.msra.mxu0 0.0
  %1549 = vmatprep.mubr.f32.mxu0 0.0
  %1550 = vmatmul.mubr.f32.gmra.mrb[0].mxu0 %v1483
  %v1551 = vpop.f32.mrb[0].mxu0
  %v1552 = vadd.f32 0.0, %v1551
  %v1553 = vpop.f32.mrb[0].mxu0
  %v1554 = vadd.f32 0.0, %v1553
  %1555 = vdwg.mxu0
  %v1557 = vrot.slane %v1552, 2
  %v1559 = vadd.f32 %v265, %v1557
  %v1560 = vxor.u32 %v1559, 2147483648
  %v1561 = vmul.f32 %v1560, 1.442695
  %v1562 = vpow.pop %v1561
  %v1563 = vadd.f32 %v1562, 1.0
  %v1564 = vrcp.pop %v1563
  %v1565 = vmul.f32 1.0, %v1564
  %v1567 = vrot.slane %v1554, 2
  %v1569 = vadd.f32 %v267, %v1567
  %v1570 = vxor.u32 %v1569, 2147483648
  %v1571 = vmul.f32 %v1570, 1.442695
  %v1572 = vpow.pop %v1571
  %v1573 = vadd.f32 %v1572, 1.0
  %v1574 = vrcp.pop %v1573
  %v1575 = vmul.f32 1.0, %v1574
  %1576 = vmatprep.subr.mxu0 0.0
  %1577 = vmatpush1.msra.mxu0 %v376
  %1578 = vmatprep.subr.mxu0 0.0
  %1579 = vmatpush1.msra.mxu0 %v377
  %1580 = vmatprep.subr.mxu0 0.0
  %1581 = vmatpush1.msra.mxu0 %v378
  %1582 = vmatprep.subr.mxu0 0.0
  %1583 = vmatpush1.msra.mxu0 %v379
  %1584 = vmatprep.subr.mxu0 0.0
  %1585 = vmatpush1.msra.mxu0 %v380
  %1586 = vmatprep.subr.mxu0 0.0
  %1587 = vmatpush1.msra.mxu0 %v381
  %1588 = vmatprep.subr.mxu0 0.0
  %1589 = vmatpush1.msra.mxu0 %v382
  %1590 = vmatprep.subr.mxu0 0.0
  %1591 = vmatpush1.msra.mxu0 %v383
  %1592 = vmatprep.subr.mxu0 0.0
  %1593 = vmatpush1.msra.mxu0 %v384
  %1594 = vmatprep.subr.mxu0 0.0
  %1595 = vmatpush1.msra.mxu0 %v385
  %1596 = vmatprep.subr.mxu0 0.0
  %1597 = vmatpush1.msra.mxu0 %v386
  %1598 = vmatprep.subr.mxu0 0.0
  %1599 = vmatpush1.msra.mxu0 %v387
  %1600 = vmatprep.subr.mxu0 0.0
  %1601 = vmatpush1.msra.mxu0 %v388
  %1602 = vmatprep.subr.mxu0 0.0
  %1603 = vmatpush1.msra.mxu0 %v389
  %1604 = vmatprep.subr.mxu0 0.0
  %1605 = vmatpush1.msra.mxu0 %v390
  %1606 = vmatprep.subr.mxu0 0.0
  %1607 = vmatpush1.msra.mxu0 %v391
  %1608 = vmatprep.subr.mxu0 0.0
  %1609 = vmatpush1.msra.mxu0 0.0
  %1610 = vmatprep.subr.mxu0 0.0
  %1611 = vmatpush1.msra.mxu0 0.0
  %1612 = vmatprep.subr.mxu0 0.0
  %1613 = vmatpush1.msra.mxu0 0.0
  %1614 = vmatprep.subr.mxu0 0.0
  %1615 = vmatpush1.msra.mxu0 0.0
  %1616 = vmatprep.subr.mxu0 0.0
  %1617 = vmatpush1.msra.mxu0 0.0
  %1618 = vmatprep.subr.mxu0 0.0
  %1619 = vmatpush1.msra.mxu0 0.0
  %1620 = vmatprep.subr.mxu0 0.0
  %1621 = vmatpush1.msra.mxu0 0.0
  %1622 = vmatprep.subr.mxu0 0.0
  %1623 = vmatpush1.msra.mxu0 0.0
  %1624 = vmatprep.subr.mxu0 0.0
  %1625 = vmatpush1.msra.mxu0 0.0
  %1626 = vmatprep.subr.mxu0 0.0
  %1627 = vmatpush1.msra.mxu0 0.0
  %1628 = vmatprep.subr.mxu0 0.0
  %1629 = vmatpush1.msra.mxu0 0.0
  %1630 = vmatprep.subr.mxu0 0.0
  %1631 = vmatpush1.msra.mxu0 0.0
  %1632 = vmatprep.subr.mxu0 0.0
  %1633 = vmatpush1.msra.mxu0 0.0
  %1634 = vmatprep.subr.mxu0 0.0
  %1635 = vmatpush1.msra.mxu0 0.0
  %1636 = vmatprep.subr.mxu0 0.0
  %1637 = vmatpush1.msra.mxu0 0.0
  %1638 = vmatprep.subr.mxu0 0.0
  %1639 = vmatpush1.msra.mxu0 0.0
  %1640 = vmatprep.mubr.f32.mxu0 0.0
  %1641 = vmatmul.mubr.f32.gmra.mrb[0].mxu0 %v1483
  %v1642 = vpop.f32.mrb[0].mxu0
  %v1643 = vadd.f32 %v409, %v1642
  %v1644 = vpop.f32.mrb[0].mxu0
  %1645 = vdwg.mxu0
  %v1647 = vrot.slane %v1643, 2
  %v1649 = vmul.f32 %v1565, %v1647
  %v1650 = vadd.f32 %v341, %v1649
  %v1651 = vtanh.pop %v1650
  %v1653 = vrot.slane %v1651, 2
  %v1655 = vsub.f32 %v1480, %v1653
  %v1657 = vrot.slane %v1655, 6
  %v1659 = vmul.f32 %v1575, %v1657
  %v1660 = vadd.f32 %v1651, %v1659
  %1661 = vst [vmem:[%s8 + $0x8] sm:$0xc0] %v1660
  // Predicated region
  $region34: #{encoder_forward.1} parent=0 // pred_check
    _
  $region35: #{encoder_forward.1} parent=0 // pred_check_branch
    %1663 = sbr.rel (0) target = $region37
  $region36: #{encoder_forward.1} parent=0 // pred_region
    _
  $region37: #{encoder_forward.1} parent=0 // pred_fallthru
    _
  // Predicated region
  $region38: #{encoder_forward.1} parent=0 // pred_check
    _
  $region39: #{encoder_forward.1} parent=0 // pred_check_branch
    %1665 = sbr.rel (0) target = $region41
  $region40: #{encoder_forward.1} parent=0 // pred_region
    _
  $region41: #{encoder_forward.1} parent=0 // pred_fallthru
    _

</llo_original>
